<compile_context>
chip_gen: v6e
topology: v6e:2x2x1
jax: 0.10.0
libtpu: 0.0.40
codegen_flags: <defaults>
</compile_context>

<pallas_src>
import functools

import jax
import jax.numpy as jnp
from jax.experimental import pallas as pl
from jax.experimental.pallas import tpu as pltpu


def _round_up(x, m):
    return ((x + m - 1) // m) * m


def _leaky_relu(v, slope=0.01):
    return jnp.where(v > 0, v, slope * v)


def connector_kernel(x_ref, w1_ref, b1_ref, w2_ref, b2_ref,
                     w3_ref, b3_ref, w4_ref, b4_ref, out_ref):
    cdt = w1_ref.dtype  # matmul operand dtype (bf16 or f32); accumulation is f32
    h = _leaky_relu(
        jnp.dot(x_ref[...], w1_ref[...], preferred_element_type=jnp.float32)
        + b1_ref[...])
    h = _leaky_relu(
        jnp.dot(h.astype(cdt), w2_ref[...], preferred_element_type=jnp.float32)
        + b2_ref[...])
    h = _leaky_relu(
        jnp.dot(h.astype(cdt), w3_ref[...], preferred_element_type=jnp.float32)
        + b3_ref[...])
    out = (jnp.dot(h.astype(cdt), w4_ref[...], preferred_element_type=jnp.float32)
           + b4_ref[...])
    out_ref[...] = out.astype(out_ref.dtype)


def _block_diag(wa, wb, in_pad, out_pad, dtype):
    """Embed two branch weights as a zero-padded block-diagonal matrix."""
    ia, oa = wa.shape
    ib, ob = wb.shape
    w = jnp.zeros((in_pad, out_pad), dtype)
    w = w.at[:ia, :oa].set(wa.astype(dtype))
    w = w.at[ia:ia + ib, oa:oa + ob].set(wb.astype(dtype))
    return w


def _cat_bias(ba, bb, out_pad):
    oa = ba.shape[-1]
    ob = bb.shape[-1]
    b = jnp.zeros((1, out_pad), jnp.float32)
    b = b.at[:, :oa].set(ba.reshape(1, -1).astype(jnp.float32))
    b = b.at[:, oa:oa + ob].set(bb.reshape(1, -1).astype(jnp.float32))
    return b


@functools.partial(jax.jit, static_argnames=("tile_m", "compute_dtype"))
def connector_forward(x1, x2, params, tile_m=256, compute_dtype=jnp.bfloat16):
    """x1: (B, N, D1), x2: (B, N, D2) -> (B, N, output_size)."""
    B, N, D1 = x1.shape
    _, _, D2 = x2.shape
    (w1a, b1a, w2a, b2a, w3a, b3a,
     w1b, b1b, w2b, b2b, w3b, b3b, w4, b4) = params
    out_size = w4.shape[1]

    # --- fused (block-diagonal) layer widths, lane-padded to multiples of 128
    F0 = D1 + D2
    F1 = w1a.shape[1] + w1b.shape[1]
    F2 = w2a.shape[1] + w2b.shape[1]
    F3 = w3a.shape[1] + w3b.shape[1]
    P0, P1, P2, P3 = (_round_up(f, 128) for f in (F0, F1, F2, F3))
    P4 = _round_up(out_size, 128)

    cdt = compute_dtype
    w1 = _block_diag(w1a, w1b, P0, P1, cdt)
    b1 = _cat_bias(b1a, b1b, P1)
    w2 = _block_diag(w2a, w2b, P1, P2, cdt)
    b2 = _cat_bias(b2a, b2b, P2)
    w3 = _block_diag(w3a, w3b, P2, P3, cdt)
    b3 = _cat_bias(b3a, b3b, P3)
    w4p = jnp.zeros((P3, P4), cdt).at[:F3, :out_size].set(w4.astype(cdt))
    b4p = jnp.zeros((1, P4), jnp.float32).at[:, :out_size].set(
        b4.reshape(1, -1).astype(jnp.float32))

    # --- row tiling: flatten (B, N); big 8-aligned tiles, keep >= 2 grid steps
    M = B * N
    M8 = _round_up(M, 8)
    if M8 >= 2 * tile_m:
        tile = tile_m
    else:
        tile = max(8, _round_up((M8 + 1) // 2, 8))
    M_pad = _round_up(M8, tile)
    grid = (M_pad // tile,)

    # [x1 | x2] packed lane-dense; concat + padding happen in the wrapper
    # (layout plumbing only), so the kernel never concats on the lane axis.
    xc = jnp.concatenate([x1.reshape(M, D1), x2.reshape(M, D2)], axis=-1)
    xc = jnp.pad(xc, ((0, M_pad - M), (0, P0 - F0))).astype(cdt)

    weights = (w1, b1, w2, b2, w3, b3, w4p, b4p)

    def _const_spec(a):
        # Full-array block, constant index_map -> loaded once, re-used per step.
        return pl.BlockSpec(a.shape, lambda i: (0, 0))

    in_specs = [pl.BlockSpec((tile, P0), lambda i: (i, 0))]
    in_specs += [_const_spec(a) for a in weights]
    out_specs = pl.BlockSpec((tile, P4), lambda i: (i, 0))

    itemsize = jnp.dtype(cdt).itemsize
    flops = 2 * M_pad * (P0 * P1 + P1 * P2 + P2 * P3 + P3 * P4)
    w_bytes = sum(int(a.size) * a.dtype.itemsize for a in weights)
    bytes_accessed = int(xc.size) * itemsize + w_bytes + M_pad * P4 * 4
    cost = pl.CostEstimate(flops=flops, transcendentals=0,
                           bytes_accessed=bytes_accessed)

    # VMEM budget: double-buffered x/out blocks + (double-buffered) weights.
    # Only raise the scoped limit when the footprint would not fit the default.
    vmem_needed = 2 * (tile * P0 * itemsize + tile * P4 * 4) + 2 * w_bytes
    cp_kwargs = dict(dimension_semantics=("parallel",))
    if vmem_needed > (24 << 20):
        cp_kwargs["vmem_limit_bytes"] = min(100 << 20, vmem_needed + (8 << 20))
    compiler_params = pltpu.CompilerParams(**cp_kwargs)

    out = pl.pallas_call(
        connector_kernel,
        out_shape=jax.ShapeDtypeStruct((M_pad, P4), x1.dtype),
        grid_spec=pl.GridSpec(grid=grid, in_specs=in_specs, out_specs=out_specs),
        compiler_params=compiler_params,
        cost_estimate=cost,
    )(xc, *weights)

    return out[:M, :out_size].reshape(B, N, out_size)


def init_params(key, input_size1, input_size2, output_size, dtype=jnp.float32):
    """Mirror the PyTorch __init__ shapes. Weights stored (in, out) so y = x@W + b."""
    h1a = input_size1 * 4
    h2a = h1a // 4
    h3a = h1a // 2
    h1b = input_size2 * 2
    h2b = h1b // 2
    h3b = h1b // 2

    dims = [
        (input_size1, h1a), (h1a, h2a), (h2a, h3a),
        (input_size2, h1b), (h1b, h2b), (h2b, h3b),
        (h3a + h3b, output_size),
    ]

    params = []
    for (fan_in, fan_out) in dims:
        key, kw, kb = jax.random.split(key, 3)
        std = (2.0 / fan_in) ** 0.5  # kaiming_normal_, fan_in, a=0
        w = (jax.random.normal(kw, (fan_in, fan_out)) * std).astype(dtype)
        bound = 1.0 / (fan_in ** 0.5)
        b = jax.random.uniform(
            kb, (1, fan_out), minval=-bound, maxval=bound
        ).astype(dtype)
        params.extend([w, b])
    return tuple(params)


def reference_forward(x1, x2, params):
    """Pure-JAX reference matching the PyTorch forward (eval mode)."""
    (w1a, b1a, w2a, b2a, w3a, b3a,
     w1b, b1b, w2b, b2b, w3b, b3b, w4, b4) = params
    dot = functools.partial(jnp.dot, precision=jax.lax.Precision.HIGHEST)
    lr = lambda v: jnp.where(v > 0, v, 0.01 * v)
    h1 = lr(dot(x1, w1a) + b1a)
    h1 = lr(dot(h1, w2a) + b2a)
    h1 = lr(dot(h1, w3a) + b3a)
    h2 = lr(dot(x2, w1b) + b1b)
    h2 = lr(dot(h2, w2b) + b2b)
    h2 = lr(dot(h2, w3b) + b3b)
    cat = jnp.concatenate([h1, h2], axis=-1)
    return dot(cat, w4) + b4


if __name__ == "__main__":
    key = jax.random.PRNGKey(0)
    k_params, k_x1, k_x2 = jax.random.split(key, 3)

    # Small shapes consistent with the module: (batch, tokens, features)
    B, N = 4, 64
    input_size1, input_size2, output_size = 32, 16, 32

    params = init_params(k_params, input_size1, input_size2, output_size)
    x1 = jax.random.normal(k_x1, (B, N, input_size1), dtype=jnp.float32)
    x2 = jax.random.normal(k_x2, (B, N, input_size2), dtype=jnp.float32)

    ref = reference_forward(x1, x2, params)

    # f32 operand path: tight check against the pure-JAX reference.
    out_f32 = jax.block_until_ready(
        connector_forward(x1, x2, params, compute_dtype=jnp.float32))
    assert out_f32.shape == (B, N, output_size), out_f32.shape
    assert jnp.allclose(out_f32, ref, atol=1e-3, rtol=1e-3), float(
        jnp.max(jnp.abs(out_f32 - ref)))

    # Default bf16 operand path (f32 accumulation): looser tolerance.
    out_bf16 = jax.block_until_ready(connector_forward(x1, x2, params))
    assert out_bf16.shape == (B, N, output_size), out_bf16.shape
    assert jnp.allclose(out_bf16, ref, atol=2e-1, rtol=2e-1), float(
        jnp.max(jnp.abs(out_bf16 - ref)))

    # TODO(synk): training-mode dropout (RNG masking) is not implemented; this
    # kernel reproduces the eval-mode (identity-dropout) forward pass only.
    print("KERNEL_OK")
</pallas_src>

<mosaic_0001>
module attributes {stable_mosaic.version = 11 : i64} {
  func.func @connector_kernel(%arg0: i32, %arg1: memref<128x128xf32, #tpu.memory_space<vmem>>, %arg2: memref<128x256xf32, #tpu.memory_space<vmem>>, %arg3: memref<1x256xf32, #tpu.memory_space<vmem>>, %arg4: memref<256x128xf32, #tpu.memory_space<vmem>>, %arg5: memref<1x128xf32, #tpu.memory_space<vmem>>, %arg6: memref<128x128xf32, #tpu.memory_space<vmem>>, %arg7: memref<1x128xf32, #tpu.memory_space<vmem>>, %arg8: memref<128x128xf32, #tpu.memory_space<vmem>>, %arg9: memref<1x128xf32, #tpu.memory_space<vmem>>, %arg10: memref<128x128xf32, #tpu.memory_space<vmem>>) attributes {dimension_semantics = [#tpu.dimension_semantics<parallel>], iteration_bounds = array<i64: 2>, scalar_prefetch = 0 : i64, scratch_operands = 0 : i64, tpu.core_type = #tpu.core_type<tc>, window_params = [{transform_indices = @transform_0, window_bounds = array<i64: 128, 128>}, {pipeline_mode = #tpu.pipeline_mode<synchronous>, transform_indices = @transform_1, window_bounds = array<i64: 128, 256>}, {pipeline_mode = #tpu.pipeline_mode<synchronous>, transform_indices = @transform_2, window_bounds = array<i64: 1, 256>}, {pipeline_mode = #tpu.pipeline_mode<synchronous>, transform_indices = @transform_3, window_bounds = array<i64: 256, 128>}, {pipeline_mode = #tpu.pipeline_mode<synchronous>, transform_indices = @transform_4, window_bounds = array<i64: 1, 128>}, {pipeline_mode = #tpu.pipeline_mode<synchronous>, transform_indices = @transform_5, window_bounds = array<i64: 128, 128>}, {pipeline_mode = #tpu.pipeline_mode<synchronous>, transform_indices = @transform_6, window_bounds = array<i64: 1, 128>}, {pipeline_mode = #tpu.pipeline_mode<synchronous>, transform_indices = @transform_7, window_bounds = array<i64: 128, 128>}, {pipeline_mode = #tpu.pipeline_mode<synchronous>, transform_indices = @transform_8, window_bounds = array<i64: 1, 128>}, {transform_indices = @transform_9, window_bounds = array<i64: 128, 128>}]} {
    %c0 = arith.constant 0 : index
    %c0_0 = arith.constant 0 : index
    %0 = vector.load %arg1[%c0, %c0_0] : memref<128x128xf32, #tpu.memory_space<vmem>>, vector<128x128xf32>
    %c0_1 = arith.constant 0 : index
    %c0_2 = arith.constant 0 : index
    %1 = vector.load %arg2[%c0_1, %c0_2] : memref<128x256xf32, #tpu.memory_space<vmem>>, vector<128x256xf32>
    %cst = arith.constant dense<0.000000e+00> : vector<128x256xf32>
    %2 = tpu.matmul %0, %1, %cst {dimension_numbers = #tpu.dot_dimension_numbers<[1], [0], [0], [1], [0, 0, 1, 1], [], []>} : vector<128x128xf32>, vector<128x256xf32>, vector<128x256xf32> -> vector<128x256xf32>
    %c0_3 = arith.constant 0 : index
    %c0_4 = arith.constant 0 : index
    %3 = vector.load %arg3[%c0_3, %c0_4] : memref<1x256xf32, #tpu.memory_space<vmem>>, vector<1x256xf32>
    %4 = vector.broadcast %3 : vector<1x256xf32> to vector<128x256xf32>
    %5 = arith.addf %2, %4 : vector<128x256xf32>
    %cst_5 = arith.constant 0.000000e+00 : f32
    %6 = vector.broadcast %cst_5 : f32 to vector<128x256xf32>
    %7 = arith.cmpf ogt, %5, %6 : vector<128x256xf32>
    %cst_6 = arith.constant 0.00999999977 : f32
    %8 = vector.broadcast %cst_6 : f32 to vector<128x256xf32>
    %9 = arith.mulf %8, %5 : vector<128x256xf32>
    %10 = arith.select %7, %5, %9 : vector<128x256xi1>, vector<128x256xf32>
    %c0_7 = arith.constant 0 : index
    %c0_8 = arith.constant 0 : index
    %11 = vector.load %arg4[%c0_7, %c0_8] : memref<256x128xf32, #tpu.memory_space<vmem>>, vector<256x128xf32>
    %cst_9 = arith.constant dense<0.000000e+00> : vector<128x128xf32>
    %12 = tpu.matmul %10, %11, %cst_9 {dimension_numbers = #tpu.dot_dimension_numbers<[1], [0], [0], [1], [0, 0, 1, 1], [], []>} : vector<128x256xf32>, vector<256x128xf32>, vector<128x128xf32> -> vector<128x128xf32>
    %c0_10 = arith.constant 0 : index
    %c0_11 = arith.constant 0 : index
    %13 = vector.load %arg5[%c0_10, %c0_11] : memref<1x128xf32, #tpu.memory_space<vmem>>, vector<1x128xf32>
    %14 = vector.broadcast %13 : vector<1x128xf32> to vector<128x128xf32>
    %15 = arith.addf %12, %14 : vector<128x128xf32>
    %cst_12 = arith.constant 0.000000e+00 : f32
    %16 = vector.broadcast %cst_12 : f32 to vector<128x128xf32>
    %17 = arith.cmpf ogt, %15, %16 : vector<128x128xf32>
    %cst_13 = arith.constant 0.00999999977 : f32
    %18 = vector.broadcast %cst_13 : f32 to vector<128x128xf32>
    %19 = arith.mulf %18, %15 : vector<128x128xf32>
    %20 = arith.select %17, %15, %19 : vector<128x128xi1>, vector<128x128xf32>
    %c0_14 = arith.constant 0 : index
    %c0_15 = arith.constant 0 : index
    %21 = vector.load %arg6[%c0_14, %c0_15] : memref<128x128xf32, #tpu.memory_space<vmem>>, vector<128x128xf32>
    %cst_16 = arith.constant dense<0.000000e+00> : vector<128x128xf32>
    %22 = tpu.matmul %20, %21, %cst_16 {dimension_numbers = #tpu.dot_dimension_numbers<[1], [0], [0], [1], [0, 0, 1, 1], [], []>} : vector<128x128xf32>, vector<128x128xf32>, vector<128x128xf32> -> vector<128x128xf32>
    %c0_17 = arith.constant 0 : index
    %c0_18 = arith.constant 0 : index
    %23 = vector.load %arg7[%c0_17, %c0_18] : memref<1x128xf32, #tpu.memory_space<vmem>>, vector<1x128xf32>
    %24 = vector.broadcast %23 : vector<1x128xf32> to vector<128x128xf32>
    %25 = arith.addf %22, %24 : vector<128x128xf32>
    %cst_19 = arith.constant 0.000000e+00 : f32
    %26 = vector.broadcast %cst_19 : f32 to vector<128x128xf32>
    %27 = arith.cmpf ogt, %25, %26 : vector<128x128xf32>
    %cst_20 = arith.constant 0.00999999977 : f32
    %28 = vector.broadcast %cst_20 : f32 to vector<128x128xf32>
    %29 = arith.mulf %28, %25 : vector<128x128xf32>
    %30 = arith.select %27, %25, %29 : vector<128x128xi1>, vector<128x128xf32>
    %c0_21 = arith.constant 0 : index
    %c0_22 = arith.constant 0 : index
    %31 = vector.load %arg8[%c0_21, %c0_22] : memref<128x128xf32, #tpu.memory_space<vmem>>, vector<128x128xf32>
    %cst_23 = arith.constant dense<0.000000e+00> : vector<128x128xf32>
    %32 = tpu.matmul %30, %31, %cst_23 {dimension_numbers = #tpu.dot_dimension_numbers<[1], [0], [0], [1], [0, 0, 1, 1], [], []>} : vector<128x128xf32>, vector<128x128xf32>, vector<128x128xf32> -> vector<128x128xf32>
    %c0_24 = arith.constant 0 : index
    %c0_25 = arith.constant 0 : index
    %33 = vector.load %arg9[%c0_24, %c0_25] : memref<1x128xf32, #tpu.memory_space<vmem>>, vector<1x128xf32>
    %34 = vector.broadcast %33 : vector<1x128xf32> to vector<128x128xf32>
    %35 = arith.addf %32, %34 : vector<128x128xf32>
    %c0_26 = arith.constant 0 : index
    %c0_27 = arith.constant 0 : index
    %36 = vector.load %arg10[%c0_26, %c0_27] : memref<128x128xf32, #tpu.memory_space<vmem>>, vector<128x128xf32>
    tpu.vector_store %arg10[%c0_26, %c0_27], %35 {strides = array<i32>} : memref<128x128xf32, #tpu.memory_space<vmem>>, vector<128x128xf32>,
    return
  }
  func.func @transform_0(%arg0: i32) -> (i32, i32) {
    %c0_i32 = arith.constant 0 : i32
    %c0_i32_0 = arith.constant 0 : i32
    return %arg0, %c0_i32 : i32, i32
  }
  func.func @transform_1(%arg0: i32) -> (i32, i32) {
    %c0_i32 = arith.constant 0 : i32
    %c0_i32_0 = arith.constant 0 : i32
    %c0_i32_1 = arith.constant 0 : i32
    return %c0_i32, %c0_i32_0 : i32, i32
  }
  func.func @transform_2(%arg0: i32) -> (i32, i32) {
    %c0_i32 = arith.constant 0 : i32
    %c0_i32_0 = arith.constant 0 : i32
    %c0_i32_1 = arith.constant 0 : i32
    return %c0_i32, %c0_i32_0 : i32, i32
  }
  func.func @transform_3(%arg0: i32) -> (i32, i32) {
    %c0_i32 = arith.constant 0 : i32
    %c0_i32_0 = arith.constant 0 : i32
    %c0_i32_1 = arith.constant 0 : i32
    return %c0_i32, %c0_i32_0 : i32, i32
  }
  func.func @transform_4(%arg0: i32) -> (i32, i32) {
    %c0_i32 = arith.constant 0 : i32
    %c0_i32_0 = arith.constant 0 : i32
    %c0_i32_1 = arith.constant 0 : i32
    return %c0_i32, %c0_i32_0 : i32, i32
  }
  func.func @transform_5(%arg0: i32) -> (i32, i32) {
    %c0_i32 = arith.constant 0 : i32
    %c0_i32_0 = arith.constant 0 : i32
    %c0_i32_1 = arith.constant 0 : i32
    return %c0_i32, %c0_i32_0 : i32, i32
  }
  func.func @transform_6(%arg0: i32) -> (i32, i32) {
    %c0_i32 = arith.constant 0 : i32
    %c0_i32_0 = arith.constant 0 : i32
    %c0_i32_1 = arith.constant 0 : i32
    return %c0_i32, %c0_i32_0 : i32, i32
  }
  func.func @transform_7(%arg0: i32) -> (i32, i32) {
    %c0_i32 = arith.constant 0 : i32
    %c0_i32_0 = arith.constant 0 : i32
    %c0_i32_1 = arith.constant 0 : i32
    return %c0_i32, %c0_i32_0 : i32, i32
  }
  func.func @transform_8(%arg0: i32) -> (i32, i32) {
    %c0_i32 = arith.constant 0 : i32
    %c0_i32_0 = arith.constant 0 : i32
    %c0_i32_1 = arith.constant 0 : i32
    return %c0_i32, %c0_i32_0 : i32, i32
  }
  func.func @transform_9(%arg0: i32) -> (i32, i32) {
    %c0_i32 = arith.constant 0 : i32
    %c0_i32_0 = arith.constant 0 : i32
    return %arg0, %c0_i32 : i32, i32
  }
}

</mosaic_0001>

<llo_original>
// kernel: connector_forward.1
$region0: #{connector_forward.1}
  #allocation0 [shape = 'u32[]', space=smem, size = 0x4, offset = 0x4, fixed_abs, tag = 'smem constant byte address 0x4 - core index']
  #allocation1 [shape = 'u32[144,128]{1,0:T(1,128)}', space=vmem, size = 0x12000, scoped, tag = 'internal scratch']
  %s0 = inlined_call_operand.vmem [shape: f32[256,128], index: 0, kind: input, shape index: {}]
  %s1 = inlined_call_operand.vmem [shape: f32[128,256], index: 1, kind: input, shape index: {}]
  %s2 = inlined_call_operand.vmem [shape: f32[1,256], index: 2, kind: input, shape index: {}]
  %s3 = inlined_call_operand.vmem [shape: f32[256,128], index: 3, kind: input, shape index: {}]
  %s4 = inlined_call_operand.vmem [shape: f32[1,128], index: 4, kind: input, shape index: {}]
  %s5 = inlined_call_operand.vmem [shape: f32[128,128], index: 5, kind: input, shape index: {}]
  %s6 = inlined_call_operand.vmem [shape: f32[1,128], index: 6, kind: input, shape index: {}]
  %s7 = inlined_call_operand.vmem [shape: f32[128,128], index: 7, kind: input, shape index: {}]
  %s8 = inlined_call_operand.vmem [shape: f32[1,128], index: 8, kind: input, shape index: {}]
  %s9 = inlined_call_operand.vmem [shape: f32[256,128], index: 9, kind: output, shape index: {}]
  %s10 = sld [smem:[#allocation0]]
  $region69: #{connector_forward.1} parent=0
    _
  %s12 = ssub.s32 1, %s10
  %s13 = scalar_select 0, %s12, %s10
  loop: start=0, step=1, limit=4
  $region2: #{connector_forward.1} parent=0 // loop_pre_header
    _
  $region3: #{connector_forward.1} parent=0 // loop_header
    %s15 = sphi 0, %s19
    %p16 = scmp.ge.s32.totalorder %s15, 4
    %s25 = sphi 0, %s27
    %s28 = sphi 0, %s25
    %s29 = sphi 0, %s28
    %s45 = sphi 0, %s29
    %s49 = sphi 0, %s49
    %s51 = sphi 0, %s49
    %s52 = sphi 0, %s51
    %s66 = sphi 0, %s52
    %s70 = sphi 0, %s70
    %s72 = sphi 0, %s70
    %s73 = sphi 0, %s72
    %s87 = sphi 0, %s73
    %s91 = sphi 0, %s91
    %s93 = sphi 0, %s91
    %s94 = sphi 0, %s93
    %s108 = sphi 0, %s94
    %s112 = sphi 0, %s112
    %s114 = sphi 0, %s112
    %s115 = sphi 0, %s114
    %s129 = sphi 0, %s115
    %s133 = sphi 0, %s133
    %s135 = sphi 0, %s133
    %s136 = sphi 0, %s135
    %s150 = sphi 0, %s136
    %s154 = sphi 0, %s154
    %s156 = sphi 0, %s154
    %s157 = sphi 0, %s156
    %s171 = sphi 0, %s157
    %s175 = sphi 0, %s175
    %s177 = sphi 0, %s175
    %s178 = sphi 0, %s177
    %s192 = sphi 0, %s178
    %s196 = sphi 0, %s196
    %s198 = sphi 0, %s196
    %s199 = sphi 0, %s198
    %s213 = sphi 0, %s199
    %s219 = sphi 0, %s221
    %s222 = sphi 0, %s219
    %s223 = sphi 0, %s222
    %s239 = sphi 0, %s223
  $region4: #{connector_forward.1} parent=0 // loop_header_branch
    %18 = sbr.rel (%p16) target = $region8
  $region5: #{connector_forward.1} parent=0 // loop_body
    %s20 = ssub.s32 %s15, 1
    %s21 = ssub.s32 %s15, 2
    %s22 = sadd.s32 %s15, 1
    %s23 = ssub.s32 %s15, %s22
    %p24 = scmp.eq.s32.totalorder %s23, 0
    %s26 = sadd.s32 %s25, 1
    %s27 = scalar_select %p24, %s25, %s26
    %p30 = pneg %p24
    %p31 = scmp.eq.s32.totalorder %s15, 1
    %p32 = por %p30, %p31
    %p33 = scmp.ne.s32.totalorder %s25, %s28
    %p34 = scmp.eq.s32.totalorder %s15, 0
    %p35 = por %p33, %p34
    %p36 = scmp.ne.s32.totalorder %s25, %s28
    %p37 = scmp.eq.s32.totalorder %s20, 1
    %p38 = por %p36, %p37
    %p39 = scmp.ne.s32.totalorder %s28, %s29
    %p40 = scmp.eq.s32.totalorder %s20, 0
    %p41 = por %p39, %p40
    %p42 = scmp.ne.s32.totalorder %s28, %s29
    %p43 = scmp.eq.s32.totalorder %s21, 1
    %p44 = por %p42, %p43
    %p46 = scmp.ne.s32.totalorder %s29, %s45
    %p47 = scmp.eq.s32.totalorder %s21, 0
    %p48 = por %p46, %p47
    %s50 = sadd.s32 %s49, 1
    %p53 = scmp.eq.s32.totalorder %s15, 1
    %p54 = scmp.ne.s32.totalorder %s49, %s51
    %p55 = scmp.eq.s32.totalorder %s15, 0
    %p56 = por %p54, %p55
    %p57 = scmp.ne.s32.totalorder %s49, %s51
    %p58 = scmp.eq.s32.totalorder %s20, 1
    %p59 = por %p57, %p58
    %p60 = scmp.ne.s32.totalorder %s51, %s52
    %p61 = scmp.eq.s32.totalorder %s20, 0
    %p62 = por %p60, %p61
    %p63 = scmp.ne.s32.totalorder %s51, %s52
    %p64 = scmp.eq.s32.totalorder %s21, 1
    %p65 = por %p63, %p64
    %p67 = scmp.ne.s32.totalorder %s52, %s66
    %p68 = scmp.eq.s32.totalorder %s21, 0
    %p69 = por %p67, %p68
    %s71 = sadd.s32 %s70, 1
    %p74 = scmp.eq.s32.totalorder %s15, 1
    %p75 = scmp.ne.s32.totalorder %s70, %s72
    %p76 = scmp.eq.s32.totalorder %s15, 0
    %p77 = por %p75, %p76
    %p78 = scmp.ne.s32.totalorder %s70, %s72
    %p79 = scmp.eq.s32.totalorder %s20, 1
    %p80 = por %p78, %p79
    %p81 = scmp.ne.s32.totalorder %s72, %s73
    %p82 = scmp.eq.s32.totalorder %s20, 0
    %p83 = por %p81, %p82
    %p84 = scmp.ne.s32.totalorder %s72, %s73
    %p85 = scmp.eq.s32.totalorder %s21, 1
    %p86 = por %p84, %p85
    %p88 = scmp.ne.s32.totalorder %s73, %s87
    %p89 = scmp.eq.s32.totalorder %s21, 0
    %p90 = por %p88, %p89
    %s92 = sadd.s32 %s91, 1
    %p95 = scmp.eq.s32.totalorder %s15, 1
    %p96 = scmp.ne.s32.totalorder %s91, %s93
    %p97 = scmp.eq.s32.totalorder %s15, 0
    %p98 = por %p96, %p97
    %p99 = scmp.ne.s32.totalorder %s91, %s93
    %p100 = scmp.eq.s32.totalorder %s20, 1
    %p101 = por %p99, %p100
    %p102 = scmp.ne.s32.totalorder %s93, %s94
    %p103 = scmp.eq.s32.totalorder %s20, 0
    %p104 = por %p102, %p103
    %p105 = scmp.ne.s32.totalorder %s93, %s94
    %p106 = scmp.eq.s32.totalorder %s21, 1
    %p107 = por %p105, %p106
    %p109 = scmp.ne.s32.totalorder %s94, %s108
    %p110 = scmp.eq.s32.totalorder %s21, 0
    %p111 = por %p109, %p110
    %s113 = sadd.s32 %s112, 1
    %p116 = scmp.eq.s32.totalorder %s15, 1
    %p117 = scmp.ne.s32.totalorder %s112, %s114
    %p118 = scmp.eq.s32.totalorder %s15, 0
    %p119 = por %p117, %p118
    %p120 = scmp.ne.s32.totalorder %s112, %s114
    %p121 = scmp.eq.s32.totalorder %s20, 1
    %p122 = por %p120, %p121
    %p123 = scmp.ne.s32.totalorder %s114, %s115
    %p124 = scmp.eq.s32.totalorder %s20, 0
    %p125 = por %p123, %p124
    %p126 = scmp.ne.s32.totalorder %s114, %s115
    %p127 = scmp.eq.s32.totalorder %s21, 1
    %p128 = por %p126, %p127
    %p130 = scmp.ne.s32.totalorder %s115, %s129
    %p131 = scmp.eq.s32.totalorder %s21, 0
    %p132 = por %p130, %p131
    %s134 = sadd.s32 %s133, 1
    %p137 = scmp.eq.s32.totalorder %s15, 1
    %p138 = scmp.ne.s32.totalorder %s133, %s135
    %p139 = scmp.eq.s32.totalorder %s15, 0
    %p140 = por %p138, %p139
    %p141 = scmp.ne.s32.totalorder %s133, %s135
    %p142 = scmp.eq.s32.totalorder %s20, 1
    %p143 = por %p141, %p142
    %p144 = scmp.ne.s32.totalorder %s135, %s136
    %p145 = scmp.eq.s32.totalorder %s20, 0
    %p146 = por %p144, %p145
    %p147 = scmp.ne.s32.totalorder %s135, %s136
    %p148 = scmp.eq.s32.totalorder %s21, 1
    %p149 = por %p147, %p148
    %p151 = scmp.ne.s32.totalorder %s136, %s150
    %p152 = scmp.eq.s32.totalorder %s21, 0
    %p153 = por %p151, %p152
    %s155 = sadd.s32 %s154, 1
    %p158 = scmp.eq.s32.totalorder %s15, 1
    %p159 = scmp.ne.s32.totalorder %s154, %s156
    %p160 = scmp.eq.s32.totalorder %s15, 0
    %p161 = por %p159, %p160
    %p162 = scmp.ne.s32.totalorder %s154, %s156
    %p163 = scmp.eq.s32.totalorder %s20, 1
    %p164 = por %p162, %p163
    %p165 = scmp.ne.s32.totalorder %s156, %s157
    %p166 = scmp.eq.s32.totalorder %s20, 0
    %p167 = por %p165, %p166
    %p168 = scmp.ne.s32.totalorder %s156, %s157
    %p169 = scmp.eq.s32.totalorder %s21, 1
    %p170 = por %p168, %p169
    %p172 = scmp.ne.s32.totalorder %s157, %s171
    %p173 = scmp.eq.s32.totalorder %s21, 0
    %p174 = por %p172, %p173
    %s176 = sadd.s32 %s175, 1
    %p179 = scmp.eq.s32.totalorder %s15, 1
    %p180 = scmp.ne.s32.totalorder %s175, %s177
    %p181 = scmp.eq.s32.totalorder %s15, 0
    %p182 = por %p180, %p181
    %p183 = scmp.ne.s32.totalorder %s175, %s177
    %p184 = scmp.eq.s32.totalorder %s20, 1
    %p185 = por %p183, %p184
    %p186 = scmp.ne.s32.totalorder %s177, %s178
    %p187 = scmp.eq.s32.totalorder %s20, 0
    %p188 = por %p186, %p187
    %p189 = scmp.ne.s32.totalorder %s177, %s178
    %p190 = scmp.eq.s32.totalorder %s21, 1
    %p191 = por %p189, %p190
    %p193 = scmp.ne.s32.totalorder %s178, %s192
    %p194 = scmp.eq.s32.totalorder %s21, 0
    %p195 = por %p193, %p194
    %s197 = sadd.s32 %s196, 1
    %p200 = scmp.eq.s32.totalorder %s15, 1
    %p201 = scmp.ne.s32.totalorder %s196, %s198
    %p202 = scmp.eq.s32.totalorder %s15, 0
    %p203 = por %p201, %p202
    %p204 = scmp.ne.s32.totalorder %s196, %s198
    %p205 = scmp.eq.s32.totalorder %s20, 1
    %p206 = por %p204, %p205
    %p207 = scmp.ne.s32.totalorder %s198, %s199
    %p208 = scmp.eq.s32.totalorder %s20, 0
    %p209 = por %p207, %p208
    %p210 = scmp.ne.s32.totalorder %s198, %s199
    %p211 = scmp.eq.s32.totalorder %s21, 1
    %p212 = por %p210, %p211
    %p214 = scmp.ne.s32.totalorder %s199, %s213
    %p215 = scmp.eq.s32.totalorder %s21, 0
    %p216 = por %p214, %p215
    %s217 = ssub.s32 %s15, %s22
    %p218 = scmp.eq.s32.totalorder %s217, 0
    %s220 = sadd.s32 %s219, 1
    %s221 = scalar_select %p218, %s219, %s220
    %p224 = pneg %p218
    %p225 = scmp.eq.s32.totalorder %s15, 1
    %p226 = por %p224, %p225
    %p227 = scmp.ne.s32.totalorder %s219, %s222
    %p228 = scmp.eq.s32.totalorder %s15, 0
    %p229 = por %p227, %p228
    %p230 = scmp.ne.s32.totalorder %s219, %s222
    %p231 = scmp.eq.s32.totalorder %s20, 1
    %p232 = por %p230, %p231
    %p233 = scmp.ne.s32.totalorder %s222, %s223
    %p234 = scmp.eq.s32.totalorder %s20, 0
    %p235 = por %p233, %p234
    %p236 = scmp.ne.s32.totalorder %s222, %s223
    %p237 = scmp.eq.s32.totalorder %s21, 1
    %p238 = por %p236, %p237
    %p240 = scmp.ne.s32.totalorder %s223, %s239
    %p241 = scmp.eq.s32.totalorder %s21, 0
    %p242 = por %p240, %p241
    %p243 = scmp.le.s32.totalorder 1, %s15
    %p244 = scmp.lt.s32.totalorder %s15, 3
    %p245 = pnand %p243, %p244
    %p246 = pneg %p245
    // Predicated region
    $region9: #{connector_forward.1} parent=5 // pred_check
      _
    $region10: #{connector_forward.1} parent=5 // pred_check_branch
      %248 = sbr.rel (%p245) target = $region12
    $region11: #{connector_forward.1} parent=5 // pred_region
      %s249 = ssub.s32 %s15, 1
      // Predicated region
      $region13: #{connector_forward.1} parent=11 // pred_check
        %p250 = pneg %p62
      $region14: #{connector_forward.1} parent=11 // pred_check_branch
        %252 = sbr.rel (%p250) target = $region16
      $region15: #{connector_forward.1} parent=11 // pred_region
        _
      $region16: #{connector_forward.1} parent=11 // pred_fallthru
        _
      // Predicated region
      $region17: #{connector_forward.1} parent=11 // pred_check
        %p253 = pneg %p83
      $region18: #{connector_forward.1} parent=11 // pred_check_branch
        %255 = sbr.rel (%p253) target = $region20
      $region19: #{connector_forward.1} parent=11 // pred_region
        _
      $region20: #{connector_forward.1} parent=11 // pred_fallthru
        _
      // Predicated region
      $region21: #{connector_forward.1} parent=11 // pred_check
        %p256 = pneg %p104
      $region22: #{connector_forward.1} parent=11 // pred_check_branch
        %258 = sbr.rel (%p256) target = $region24
      $region23: #{connector_forward.1} parent=11 // pred_region
        _
      $region24: #{connector_forward.1} parent=11 // pred_fallthru
        _
      // Predicated region
      $region25: #{connector_forward.1} parent=11 // pred_check
        %p259 = pneg %p125
      $region26: #{connector_forward.1} parent=11 // pred_check_branch
        %261 = sbr.rel (%p259) target = $region28
      $region27: #{connector_forward.1} parent=11 // pred_region
        _
      $region28: #{connector_forward.1} parent=11 // pred_fallthru
        _
      // Predicated region
      $region29: #{connector_forward.1} parent=11 // pred_check
        %p262 = pneg %p146
      $region30: #{connector_forward.1} parent=11 // pred_check_branch
        %264 = sbr.rel (%p262) target = $region32
      $region31: #{connector_forward.1} parent=11 // pred_region
        _
      $region32: #{connector_forward.1} parent=11 // pred_fallthru
        _
      // Predicated region
      $region33: #{connector_forward.1} parent=11 // pred_check
        %p265 = pneg %p167
      $region34: #{connector_forward.1} parent=11 // pred_check_branch
        %267 = sbr.rel (%p265) target = $region36
      $region35: #{connector_forward.1} parent=11 // pred_region
        _
      $region36: #{connector_forward.1} parent=11 // pred_fallthru
        _
      // Predicated region
      $region37: #{connector_forward.1} parent=11 // pred_check
        %p268 = pneg %p188
      $region38: #{connector_forward.1} parent=11 // pred_check_branch
        %270 = sbr.rel (%p268) target = $region40
      $region39: #{connector_forward.1} parent=11 // pred_region
        _
      $region40: #{connector_forward.1} parent=11 // pred_fallthru
        _
      // Predicated region
      $region41: #{connector_forward.1} parent=11 // pred_check
        %p271 = pneg %p209
      $region42: #{connector_forward.1} parent=11 // pred_check_branch
        %273 = sbr.rel (%p271) target = $region44
      $region43: #{connector_forward.1} parent=11 // pred_region
        _
      $region44: #{connector_forward.1} parent=11 // pred_fallthru
        _
    $region12: #{connector_forward.1} parent=5 // pred_fallthru
      _
    %p274 = scmp.lt.s32.totalorder %s15, 2
    // Predicated region
    $region45: #{connector_forward.1} parent=5 // pred_check
      %p275 = pneg %p274
    $region46: #{connector_forward.1} parent=5 // pred_check_branch
      %277 = sbr.rel (%p275) target = $region48
    $region47: #{connector_forward.1} parent=5 // pred_region
      // Predicated region
      $region49: #{connector_forward.1} parent=47 // pred_check
        %p278 = pneg %p35
      $region50: #{connector_forward.1} parent=47 // pred_check_branch
        %280 = sbr.rel (%p278) target = $region52
      $region51: #{connector_forward.1} parent=47 // pred_region
        %s281 = smul.u32 16, %s15
        %p282 = scmp.lt.s32.totalorder %s281, 31
        %s283 = scalar_select %p282, %s281, 31
        %s284 = smul.addr %s283, 8
        %s285 = scalar_lea.vmem %s0, %s284
        %s286 = smul.u32 16, %s15
      $region52: #{connector_forward.1} parent=47 // pred_fallthru
        _
    $region48: #{connector_forward.1} parent=5 // pred_fallthru
      _
    %p287 = scmp.le.s32.totalorder 1, %s15
    %p288 = scmp.lt.s32.totalorder %s15, 3
    %p289 = pnand %p287, %p288
    %p290 = pneg %p289
    // Predicated region
    $region53: #{connector_forward.1} parent=5 // pred_check
      _
    $region54: #{connector_forward.1} parent=5 // pred_check_branch
      %292 = sbr.rel (%p289) target = $region56
    $region55: #{connector_forward.1} parent=5 // pred_region
      %s293 = ssub.s32 %s15, 1
      %s294 = smul.u32 16, %s20
      %p295 = scmp.lt.s32.totalorder %s294, 31
      %s296 = scalar_select %p295, %s294, 31
      %s297 = smul.addr %s296, 8
      %s298 = scalar_lea.vmem %s0, %s297
      %p299 = pneg %p41
      %p300 = pneg %p38
      %p301 = pneg %p62
      %p302 = pneg %p59
      %p303 = pneg %p83
      %p304 = pneg %p80
      %p305 = pneg %p104
      %p306 = pneg %p101
      %p307 = pneg %p125
      %p308 = pneg %p122
      %p309 = pneg %p146
      %p310 = pneg %p143
      %p311 = pneg %p167
      %p312 = pneg %p164
      %p313 = pneg %p188
      %p314 = pneg %p185
      %p315 = pneg %p209
      %p316 = pneg %p206
      %p317 = pneg %p235
      %p318 = pneg %p232
      %s319 = smul.u32 16, %s20
      %p320 = scmp.lt.s32.totalorder %s319, 31
      %s321 = scalar_select %p320, %s319, 31
      %s322 = smul.addr %s321, 8
      %s323 = scalar_lea.vmem %s9, %s322
      %s324 = smul.u32 16, %s20
      %p325 = scmp.lt.s32.totalorder %s324, 31
      %s326 = scalar_select %p325, %s324, 31
      %s327 = smul.addr %s326, 8
      %s328 = scalar_lea.vmem %s0, %s327
      %s329 = smul.u32 16, %s20
      %s330 = smul.u32 16, %s20
      %p331 = scmp.lt.s32.totalorder %s330, 31
      %s332 = scalar_select %p331, %s330, 31
      %s333 = smul.addr %s332, 8
      %s334 = scalar_lea.vmem %s9, %s333
      %s335 = smul.u32 16, %s20
      %v336 = vld [vmem:[%s328] sm:$0xff]
      %v337 = vld [vmem:[%s328 + $0x8] sm:$0xff]
      %v338 = vld [vmem:[%s328 + $0x10] sm:$0xff]
      %v339 = vld [vmem:[%s328 + $0x18] sm:$0xff]
      %v340 = vld [vmem:[%s328 + $0x20] sm:$0xff]
      %v341 = vld [vmem:[%s328 + $0x28] sm:$0xff]
      %v342 = vld [vmem:[%s328 + $0x30] sm:$0xff]
      %v343 = vld [vmem:[%s328 + $0x38] sm:$0xff]
      %v344 = vld [vmem:[%s328 + $0x40] sm:$0xff]
      %v345 = vld [vmem:[%s328 + $0x48] sm:$0xff]
      %v346 = vld [vmem:[%s328 + $0x50] sm:$0xff]
      %v347 = vld [vmem:[%s328 + $0x58] sm:$0xff]
      %v348 = vld [vmem:[%s328 + $0x60] sm:$0xff]
      %v349 = vld [vmem:[%s328 + $0x68] sm:$0xff]
      %v350 = vld [vmem:[%s328 + $0x70] sm:$0xff]
      %v351 = vld [vmem:[%s328 + $0x78] sm:$0xff]
      %v352 = vld [vmem:[%s1] sm:$0xff]
      %v353 = vld [vmem:[%s1 + $0x8] sm:$0xff]
      %v354 = vld [vmem:[%s1 + $0x10] sm:$0xff]
      %v355 = vld [vmem:[%s1 + $0x18] sm:$0xff]
      %v356 = vld [vmem:[%s1 + $0x20] sm:$0xff]
      %v357 = vld [vmem:[%s1 + $0x28] sm:$0xff]
      %v358 = vld [vmem:[%s1 + $0x30] sm:$0xff]
      %v359 = vld [vmem:[%s1 + $0x38] sm:$0xff]
      %v360 = vld [vmem:[%s1 + $0x40] sm:$0xff]
      %v361 = vld [vmem:[%s1 + $0x48] sm:$0xff]
      %v362 = vld [vmem:[%s1 + $0x50] sm:$0xff]
      %v363 = vld [vmem:[%s1 + $0x58] sm:$0xff]
      %v364 = vld [vmem:[%s1 + $0x60] sm:$0xff]
      %v365 = vld [vmem:[%s1 + $0x68] sm:$0xff]
      %v366 = vld [vmem:[%s1 + $0x70] sm:$0xff]
      %v367 = vld [vmem:[%s1 + $0x78] sm:$0xff]
      %v368 = vld [vmem:[%s1 + $0x80] sm:$0xff]
      %v369 = vld [vmem:[%s1 + $0x88] sm:$0xff]
      %v370 = vld [vmem:[%s1 + $0x90] sm:$0xff]
      %v371 = vld [vmem:[%s1 + $0x98] sm:$0xff]
      %v372 = vld [vmem:[%s1 + $0xa0] sm:$0xff]
      %v373 = vld [vmem:[%s1 + $0xa8] sm:$0xff]
      %v374 = vld [vmem:[%s1 + $0xb0] sm:$0xff]
      %v375 = vld [vmem:[%s1 + $0xb8] sm:$0xff]
      %v376 = vld [vmem:[%s1 + $0xc0] sm:$0xff]
      %v377 = vld [vmem:[%s1 + $0xc8] sm:$0xff]
      %v378 = vld [vmem:[%s1 + $0xd0] sm:$0xff]
      %v379 = vld [vmem:[%s1 + $0xd8] sm:$0xff]
      %v380 = vld [vmem:[%s1 + $0xe0] sm:$0xff]
      %v381 = vld [vmem:[%s1 + $0xe8] sm:$0xff]
      %v382 = vld [vmem:[%s1 + $0xf0] sm:$0xff]
      %v383 = vld [vmem:[%s1 + $0xf8] sm:$0xff]
      %v384 = vld [vmem:[%s2] sm:$0x3]
      %v386 = vlaneseq
      %v387 = vshrl.u32 %v386, 7
      %v388 = vsub.s32 0, %v387
      %v389 = vrot.slane %v384, %v388
      %v390 = vlaneseq
      %v391 = vshrl.u32 %v390, 7
      %v392 = vsub.s32 1, %v391
      %v393 = vrot.slane %v384, %v392
      %396 = vmatprep.subr.mxu0 %v383
      %397 = vmatpush1.msra.mxu0 %v382
      %398 = vmatprep.subr.mxu0 %v381
      %399 = vmatpush1.msra.mxu0 %v380
      %400 = vmatprep.subr.mxu0 %v379
      %401 = vmatpush1.msra.mxu0 %v378
      %402 = vmatprep.subr.mxu0 %v377
      %403 = vmatpush1.msra.mxu0 %v376
      %404 = vmatprep.subr.mxu0 %v375
      %405 = vmatpush1.msra.mxu0 %v374
      %406 = vmatprep.subr.mxu0 %v373
      %407 = vmatpush1.msra.mxu0 %v372
      %408 = vmatprep.subr.mxu0 %v371
      %409 = vmatpush1.msra.mxu0 %v370
      %410 = vmatprep.subr.mxu0 %v369
      %411 = vmatpush1.msra.mxu0 %v368
      %412 = vmatprep.subr.mxu0 %v367
      %413 = vmatpush1.msra.mxu0 %v366
      %414 = vmatprep.subr.mxu0 %v365
      %415 = vmatpush1.msra.mxu0 %v364
      %416 = vmatprep.subr.mxu0 %v363
      %417 = vmatpush1.msra.mxu0 %v362
      %418 = vmatprep.subr.mxu0 %v361
      %419 = vmatpush1.msra.mxu0 %v360
      %420 = vmatprep.subr.mxu0 %v359
      %421 = vmatpush1.msra.mxu0 %v358
      %422 = vmatprep.subr.mxu0 %v357
      %423 = vmatpush1.msra.mxu0 %v356
      %424 = vmatprep.subr.mxu0 %v355
      %425 = vmatpush1.msra.mxu0 %v354
      %426 = vmatprep.subr.mxu0 %v353
      %427 = vmatpush1.msra.mxu0 %v352
      %428 = vmatprep.subr.mxu0 0.0
      %429 = vmatpush2.msra.mxu0 0.0
      %430 = vmatprep.subr.mxu0 0.0
      %431 = vmatpush2.msra.mxu0 0.0
      %432 = vmatprep.subr.mxu0 0.0
      %433 = vmatpush2.msra.mxu0 0.0
      %434 = vmatprep.subr.mxu0 0.0
      %435 = vmatpush2.msra.mxu0 0.0
      %436 = vmatprep.subr.mxu0 0.0
      %437 = vmatpush2.msra.mxu0 0.0
      %438 = vmatprep.subr.mxu0 0.0
      %439 = vmatpush2.msra.mxu0 0.0
      %440 = vmatprep.subr.mxu0 0.0
      %441 = vmatpush2.msra.mxu0 0.0
      %442 = vmatprep.subr.mxu0 0.0
      %443 = vmatpush2.msra.mxu0 0.0
      %444 = vmatprep.subr.mxu0 0.0
      %445 = vmatpush2.msra.mxu0 0.0
      %446 = vmatprep.subr.mxu0 0.0
      %447 = vmatpush2.msra.mxu0 0.0
      %448 = vmatprep.subr.mxu0 0.0
      %449 = vmatpush2.msra.mxu0 0.0
      %450 = vmatprep.subr.mxu0 0.0
      %451 = vmatpush2.msra.mxu0 0.0
      %452 = vmatprep.subr.mxu0 0.0
      %453 = vmatpush2.msra.mxu0 0.0
      %454 = vmatprep.subr.mxu0 0.0
      %455 = vmatpush2.msra.mxu0 0.0
      %456 = vmatprep.subr.mxu0 0.0
      %457 = vmatpush2.msra.mxu0 0.0
      %458 = vmatprep.subr.mxu0 0.0
      %459 = vmatpush2.msra.mxu0 0.0
      %460 = vmatprep.mubr.f32.mxu0 0.0
      %461 = vmatmul.mubr.f32.gmra.mxu0 %v336
      %v462 = vpop.f32.mrf.mxu0
      %v463 = vadd.f32 %v389, %v462
      %v464 = vpop.f32.mrf.mxu0
      %v465 = vadd.f32 %v393, %v464
      %466 = vmatprep.mubr.f32.mxu0 0.0
      %467 = vmatmul.mubr.f32.gmra.mxu0 %v337
      %v468 = vpop.f32.mrf.mxu0
      %v469 = vadd.f32 %v389, %v468
      %v470 = vpop.f32.mrf.mxu0
      %v471 = vadd.f32 %v393, %v470
      %472 = vmatprep.mubr.f32.mxu0 0.0
      %473 = vmatmul.mubr.f32.gmra.mxu0 %v338
      %v474 = vpop.f32.mrf.mxu0
      %v475 = vadd.f32 %v389, %v474
      %v476 = vpop.f32.mrf.mxu0
      %v477 = vadd.f32 %v393, %v476
      %478 = vmatprep.mubr.f32.mxu0 0.0
      %479 = vmatmul.mubr.f32.gmra.mxu0 %v339
      %v480 = vpop.f32.mrf.mxu0
      %v481 = vadd.f32 %v389, %v480
      %v482 = vpop.f32.mrf.mxu0
      %v483 = vadd.f32 %v393, %v482
      %484 = vmatprep.mubr.f32.mxu0 0.0
      %485 = vmatmul.mubr.f32.gmra.mxu0 %v340
      %v486 = vpop.f32.mrf.mxu0
      %v487 = vadd.f32 %v389, %v486
      %v488 = vpop.f32.mrf.mxu0
      %v489 = vadd.f32 %v393, %v488
      %490 = vmatprep.mubr.f32.mxu0 0.0
      %491 = vmatmul.mubr.f32.gmra.mxu0 %v341
      %v492 = vpop.f32.mrf.mxu0
      %v493 = vadd.f32 %v389, %v492
      %v494 = vpop.f32.mrf.mxu0
      %v495 = vadd.f32 %v393, %v494
      %496 = vmatprep.mubr.f32.mxu0 0.0
      %497 = vmatmul.mubr.f32.gmra.mxu0 %v342
      %v498 = vpop.f32.mrf.mxu0
      %v499 = vadd.f32 %v389, %v498
      %v500 = vpop.f32.mrf.mxu0
      %v501 = vadd.f32 %v393, %v500
      %502 = vmatprep.mubr.f32.mxu0 0.0
      %503 = vmatmul.mubr.f32.gmra.mxu0 %v343
      %v504 = vpop.f32.mrf.mxu0
      %v505 = vadd.f32 %v389, %v504
      %v506 = vpop.f32.mrf.mxu0
      %v507 = vadd.f32 %v393, %v506
      %508 = vmatprep.mubr.f32.mxu0 0.0
      %509 = vmatmul.mubr.f32.gmra.mxu0 %v344
      %v510 = vpop.f32.mrf.mxu0
      %v511 = vadd.f32 %v389, %v510
      %v512 = vpop.f32.mrf.mxu0
      %v513 = vadd.f32 %v393, %v512
      %514 = vmatprep.mubr.f32.mxu0 0.0
      %515 = vmatmul.mubr.f32.gmra.mxu0 %v345
      %v516 = vpop.f32.mrf.mxu0
      %v517 = vadd.f32 %v389, %v516
      %v518 = vpop.f32.mrf.mxu0
      %v519 = vadd.f32 %v393, %v518
      %520 = vmatprep.mubr.f32.mxu0 0.0
      %521 = vmatmul.mubr.f32.gmra.mxu0 %v346
      %v522 = vpop.f32.mrf.mxu0
      %v523 = vadd.f32 %v389, %v522
      %v524 = vpop.f32.mrf.mxu0
      %v525 = vadd.f32 %v393, %v524
      %526 = vmatprep.mubr.f32.mxu0 0.0
      %527 = vmatmul.mubr.f32.gmra.mxu0 %v347
      %v528 = vpop.f32.mrf.mxu0
      %v529 = vadd.f32 %v389, %v528
      %v530 = vpop.f32.mrf.mxu0
      %v531 = vadd.f32 %v393, %v530
      %532 = vmatprep.mubr.f32.mxu0 0.0
      %533 = vmatmul.mubr.f32.gmra.mxu0 %v348
      %v534 = vpop.f32.mrf.mxu0
      %v535 = vadd.f32 %v389, %v534
      %v536 = vpop.f32.mrf.mxu0
      %v537 = vadd.f32 %v393, %v536
      %538 = vmatprep.mubr.f32.mxu0 0.0
      %539 = vmatmul.mubr.f32.gmra.mxu0 %v349
      %v540 = vpop.f32.mrf.mxu0
      %v541 = vadd.f32 %v389, %v540
      %v542 = vpop.f32.mrf.mxu0
      %v543 = vadd.f32 %v393, %v542
      %544 = vmatprep.mubr.f32.mxu0 0.0
      %545 = vmatmul.mubr.f32.gmra.mxu0 %v350
      %v546 = vpop.f32.mrf.mxu0
      %v547 = vadd.f32 %v389, %v546
      %v548 = vpop.f32.mrf.mxu0
      %v549 = vadd.f32 %v393, %v548
      %550 = vmatprep.mubr.f32.mxu0 0.0
      %551 = vmatmul.mubr.f32.gmra.mxu0 %v351
      %v552 = vpop.f32.mrf.mxu0
      %v553 = vadd.f32 %v389, %v552
      %v554 = vpop.f32.mrf.mxu0
      %v555 = vadd.f32 %v393, %v554
      %556 = vdwg.mxu0
      %vm557 = vcmp.gt.f32.partialorder %v463, 0.0
      %vm558 = vcmp.gt.f32.partialorder %v465, 0.0
      %vm559 = vcmp.gt.f32.partialorder %v469, 0.0
      %vm560 = vcmp.gt.f32.partialorder %v471, 0.0
      %vm561 = vcmp.gt.f32.partialorder %v475, 0.0
      %vm562 = vcmp.gt.f32.partialorder %v477, 0.0
      %vm563 = vcmp.gt.f32.partialorder %v481, 0.0
      %vm564 = vcmp.gt.f32.partialorder %v483, 0.0
      %vm565 = vcmp.gt.f32.partialorder %v487, 0.0
      %vm566 = vcmp.gt.f32.partialorder %v489, 0.0
      %vm567 = vcmp.gt.f32.partialorder %v493, 0.0
      %vm568 = vcmp.gt.f32.partialorder %v495, 0.0
      %vm569 = vcmp.gt.f32.partialorder %v499, 0.0
      %vm570 = vcmp.gt.f32.partialorder %v501, 0.0
      %vm571 = vcmp.gt.f32.partialorder %v505, 0.0
      %vm572 = vcmp.gt.f32.partialorder %v507, 0.0
      %vm573 = vcmp.gt.f32.partialorder %v511, 0.0
      %vm574 = vcmp.gt.f32.partialorder %v513, 0.0
      %vm575 = vcmp.gt.f32.partialorder %v517, 0.0
      %vm576 = vcmp.gt.f32.partialorder %v519, 0.0
      %vm577 = vcmp.gt.f32.partialorder %v523, 0.0
      %vm578 = vcmp.gt.f32.partialorder %v525, 0.0
      %vm579 = vcmp.gt.f32.partialorder %v529, 0.0
      %vm580 = vcmp.gt.f32.partialorder %v531, 0.0
      %vm581 = vcmp.gt.f32.partialorder %v535, 0.0
      %vm582 = vcmp.gt.f32.partialorder %v537, 0.0
      %vm583 = vcmp.gt.f32.partialorder %v541, 0.0
      %vm584 = vcmp.gt.f32.partialorder %v543, 0.0
      %vm585 = vcmp.gt.f32.partialorder %v547, 0.0
      %vm586 = vcmp.gt.f32.partialorder %v549, 0.0
      %vm587 = vcmp.gt.f32.partialorder %v553, 0.0
      %vm588 = vcmp.gt.f32.partialorder %v555, 0.0
      %v589 = vmul.f32 %v463, 0.01
      %v590 = vmul.f32 %v465, 0.01
      %v591 = vmul.f32 %v469, 0.01
      %v592 = vmul.f32 %v471, 0.01
      %v593 = vmul.f32 %v475, 0.01
      %v594 = vmul.f32 %v477, 0.01
      %v595 = vmul.f32 %v481, 0.01
      %v596 = vmul.f32 %v483, 0.01
      %v597 = vmul.f32 %v487, 0.01
      %v598 = vmul.f32 %v489, 0.01
      %v599 = vmul.f32 %v493, 0.01
      %v600 = vmul.f32 %v495, 0.01
      %v601 = vmul.f32 %v499, 0.01
      %v602 = vmul.f32 %v501, 0.01
      %v603 = vmul.f32 %v505, 0.01
      %v604 = vmul.f32 %v507, 0.01
      %v605 = vmul.f32 %v511, 0.01
      %v606 = vmul.f32 %v513, 0.01
      %v607 = vmul.f32 %v517, 0.01
      %v608 = vmul.f32 %v519, 0.01
      %v609 = vmul.f32 %v523, 0.01
      %v610 = vmul.f32 %v525, 0.01
      %v611 = vmul.f32 %v529, 0.01
      %v612 = vmul.f32 %v531, 0.01
      %v613 = vmul.f32 %v535, 0.01
      %v614 = vmul.f32 %v537, 0.01
      %v615 = vmul.f32 %v541, 0.01
      %v616 = vmul.f32 %v543, 0.01
      %v617 = vmul.f32 %v547, 0.01
      %v618 = vmul.f32 %v549, 0.01
      %v619 = vmul.f32 %v553, 0.01
      %v620 = vmul.f32 %v555, 0.01
      %v621 = vsel %vm557, %v463, %v589
      %v622 = vsel %vm558, %v465, %v590
      %v623 = vsel %vm559, %v469, %v591
      %v624 = vsel %vm560, %v471, %v592
      %v625 = vsel %vm561, %v475, %v593
      %v626 = vsel %vm562, %v477, %v594
      %v627 = vsel %vm563, %v481, %v595
      %v628 = vsel %vm564, %v483, %v596
      %v629 = vsel %vm565, %v487, %v597
      %v630 = vsel %vm566, %v489, %v598
      %v631 = vsel %vm567, %v493, %v599
      %v632 = vsel %vm568, %v495, %v600
      %v633 = vsel %vm569, %v499, %v601
      %v634 = vsel %vm570, %v501, %v602
      %v635 = vsel %vm571, %v505, %v603
      %v636 = vsel %vm572, %v507, %v604
      %v637 = vsel %vm573, %v511, %v605
      %v638 = vsel %vm574, %v513, %v606
      %v639 = vsel %vm575, %v517, %v607
      %v640 = vsel %vm576, %v519, %v608
      %v641 = vsel %vm577, %v523, %v609
      %v642 = vsel %vm578, %v525, %v610
      %v643 = vsel %vm579, %v529, %v611
      %v644 = vsel %vm580, %v531, %v612
      %v645 = vsel %vm581, %v535, %v613
      %v646 = vsel %vm582, %v537, %v614
      %v647 = vsel %vm583, %v541, %v615
      %v648 = vsel %vm584, %v543, %v616
      %v649 = vsel %vm585, %v547, %v617
      %v650 = vsel %vm586, %v549, %v618
      %v651 = vsel %vm587, %v553, %v619
      %v652 = vsel %vm588, %v555, %v620
      %v653 = vld [vmem:[%s3] sm:$0xff]
      %v654 = vld [vmem:[%s3 + $0x8] sm:$0xff]
      %v655 = vld [vmem:[%s3 + $0x10] sm:$0xff]
      %v656 = vld [vmem:[%s3 + $0x18] sm:$0xff]
      %v657 = vld [vmem:[%s3 + $0x20] sm:$0xff]
      %v658 = vld [vmem:[%s3 + $0x28] sm:$0xff]
      %v659 = vld [vmem:[%s3 + $0x30] sm:$0xff]
      %v660 = vld [vmem:[%s3 + $0x38] sm:$0xff]
      %v661 = vld [vmem:[%s3 + $0x40] sm:$0xff]
      %v662 = vld [vmem:[%s3 + $0x48] sm:$0xff]
      %v663 = vld [vmem:[%s3 + $0x50] sm:$0xff]
      %v664 = vld [vmem:[%s3 + $0x58] sm:$0xff]
      %v665 = vld [vmem:[%s3 + $0x60] sm:$0xff]
      %v666 = vld [vmem:[%s3 + $0x68] sm:$0xff]
      %v667 = vld [vmem:[%s3 + $0x70] sm:$0xff]
      %v668 = vld [vmem:[%s3 + $0x78] sm:$0xff]
      %v669 = vld [vmem:[%s3 + $0x80] sm:$0xff]
      %v670 = vld [vmem:[%s3 + $0x88] sm:$0xff]
      %v671 = vld [vmem:[%s3 + $0x90] sm:$0xff]
      %v672 = vld [vmem:[%s3 + $0x98] sm:$0xff]
      %v673 = vld [vmem:[%s3 + $0xa0] sm:$0xff]
      %v674 = vld [vmem:[%s3 + $0xa8] sm:$0xff]
      %v675 = vld [vmem:[%s3 + $0xb0] sm:$0xff]
      %v676 = vld [vmem:[%s3 + $0xb8] sm:$0xff]
      %v677 = vld [vmem:[%s3 + $0xc0] sm:$0xff]
      %v678 = vld [vmem:[%s3 + $0xc8] sm:$0xff]
      %v679 = vld [vmem:[%s3 + $0xd0] sm:$0xff]
      %v680 = vld [vmem:[%s3 + $0xd8] sm:$0xff]
      %v681 = vld [vmem:[%s3 + $0xe0] sm:$0xff]
      %v682 = vld [vmem:[%s3 + $0xe8] sm:$0xff]
      %v683 = vld [vmem:[%s3 + $0xf0] sm:$0xff]
      %v684 = vld [vmem:[%s3 + $0xf8] sm:$0xff]
      %v685 = vld [vmem:[%s4] sm:$0x1]
      %v687 = vlaneseq
      %v688 = vshrl.u32 %v687, 7
      %v689 = vsub.s32 0, %v688
      %v690 = vrot.slane %v685, %v689
      %692 = vmatprep.subr.mxu0 0.0
      %693 = vmatpush1.msra.mxu0 %v668
      %694 = vmatprep.subr.mxu0 0.0
      %695 = vmatpush1.msra.mxu0 %v667
      %696 = vmatprep.subr.mxu0 0.0
      %697 = vmatpush1.msra.mxu0 %v666
      %698 = vmatprep.subr.mxu0 0.0
      %699 = vmatpush1.msra.mxu0 %v665
      %700 = vmatprep.subr.mxu0 0.0
      %701 = vmatpush1.msra.mxu0 %v664
      %702 = vmatprep.subr.mxu0 0.0
      %703 = vmatpush1.msra.mxu0 %v663
      %704 = vmatprep.subr.mxu0 0.0
      %705 = vmatpush1.msra.mxu0 %v662
      %706 = vmatprep.subr.mxu0 0.0
      %707 = vmatpush1.msra.mxu0 %v661
      %708 = vmatprep.subr.mxu0 0.0
      %709 = vmatpush1.msra.mxu0 %v660
      %710 = vmatprep.subr.mxu0 0.0
      %711 = vmatpush1.msra.mxu0 %v659
      %712 = vmatprep.subr.mxu0 0.0
      %713 = vmatpush1.msra.mxu0 %v658
      %714 = vmatprep.subr.mxu0 0.0
      %715 = vmatpush1.msra.mxu0 %v657
      %716 = vmatprep.subr.mxu0 0.0
      %717 = vmatpush1.msra.mxu0 %v656
      %718 = vmatprep.subr.mxu0 0.0
      %719 = vmatpush1.msra.mxu0 %v655
      %720 = vmatprep.subr.mxu0 0.0
      %721 = vmatpush1.msra.mxu0 %v654
      %722 = vmatprep.subr.mxu0 0.0
      %723 = vmatpush1.msra.mxu0 %v653
      %724 = vmatprep.subr.mxu0 0.0
      %725 = vmatpush2.msra.mxu0 %v684
      %726 = vmatprep.subr.mxu0 0.0
      %727 = vmatpush2.msra.mxu0 %v683
      %728 = vmatprep.subr.mxu0 0.0
      %729 = vmatpush2.msra.mxu0 %v682
      %730 = vmatprep.subr.mxu0 0.0
      %731 = vmatpush2.msra.mxu0 %v681
      %732 = vmatprep.subr.mxu0 0.0
      %733 = vmatpush2.msra.mxu0 %v680
      %734 = vmatprep.subr.mxu0 0.0
      %735 = vmatpush2.msra.mxu0 %v679
      %736 = vmatprep.subr.mxu0 0.0
      %737 = vmatpush2.msra.mxu0 %v678
      %738 = vmatprep.subr.mxu0 0.0
      %739 = vmatpush2.msra.mxu0 %v677
      %740 = vmatprep.subr.mxu0 0.0
      %741 = vmatpush2.msra.mxu0 %v676
      %742 = vmatprep.subr.mxu0 0.0
      %743 = vmatpush2.msra.mxu0 %v675
      %744 = vmatprep.subr.mxu0 0.0
      %745 = vmatpush2.msra.mxu0 %v674
      %746 = vmatprep.subr.mxu0 0.0
      %747 = vmatpush2.msra.mxu0 %v673
      %748 = vmatprep.subr.mxu0 0.0
      %749 = vmatpush2.msra.mxu0 %v672
      %750 = vmatprep.subr.mxu0 0.0
      %751 = vmatpush2.msra.mxu0 %v671
      %752 = vmatprep.subr.mxu0 0.0
      %753 = vmatpush2.msra.mxu0 %v670
      %754 = vmatprep.subr.mxu0 0.0
      %755 = vmatpush2.msra.mxu0 %v669
      %756 = vmatprep.mubr.f32.mxu0 %v622
      %757 = vmatmul.mubr.f32.gmra.mxu0 %v621
      %v758 = vpop.f32.mrf.mxu0
      %v759 = vadd.f32 %v690, %v758
      %v760 = vpop.f32.mrf.mxu0
      %761 = vmatprep.mubr.f32.mxu0 %v624
      %762 = vmatmul.mubr.f32.gmra.mxu0 %v623
      %v763 = vpop.f32.mrf.mxu0
      %v764 = vadd.f32 %v690, %v763
      %v765 = vpop.f32.mrf.mxu0
      %766 = vmatprep.mubr.f32.mxu0 %v626
      %767 = vmatmul.mubr.f32.gmra.mxu0 %v625
      %v768 = vpop.f32.mrf.mxu0
      %v769 = vadd.f32 %v690, %v768
      %v770 = vpop.f32.mrf.mxu0
      %771 = vmatprep.mubr.f32.mxu0 %v628
      %772 = vmatmul.mubr.f32.gmra.mxu0 %v627
      %v773 = vpop.f32.mrf.mxu0
      %v774 = vadd.f32 %v690, %v773
      %v775 = vpop.f32.mrf.mxu0
      %776 = vmatprep.mubr.f32.mxu0 %v630
      %777 = vmatmul.mubr.f32.gmra.mxu0 %v629
      %v778 = vpop.f32.mrf.mxu0
      %v779 = vadd.f32 %v690, %v778
      %v780 = vpop.f32.mrf.mxu0
      %781 = vmatprep.mubr.f32.mxu0 %v632
      %782 = vmatmul.mubr.f32.gmra.mxu0 %v631
      %v783 = vpop.f32.mrf.mxu0
      %v784 = vadd.f32 %v690, %v783
      %v785 = vpop.f32.mrf.mxu0
      %786 = vmatprep.mubr.f32.mxu0 %v634
      %787 = vmatmul.mubr.f32.gmra.mxu0 %v633
      %v788 = vpop.f32.mrf.mxu0
      %v789 = vadd.f32 %v690, %v788
      %v790 = vpop.f32.mrf.mxu0
      %791 = vmatprep.mubr.f32.mxu0 %v636
      %792 = vmatmul.mubr.f32.gmra.mxu0 %v635
      %v793 = vpop.f32.mrf.mxu0
      %v794 = vadd.f32 %v690, %v793
      %v795 = vpop.f32.mrf.mxu0
      %796 = vmatprep.mubr.f32.mxu0 %v638
      %797 = vmatmul.mubr.f32.gmra.mxu0 %v637
      %v798 = vpop.f32.mrf.mxu0
      %v799 = vadd.f32 %v690, %v798
      %v800 = vpop.f32.mrf.mxu0
      %801 = vmatprep.mubr.f32.mxu0 %v640
      %802 = vmatmul.mubr.f32.gmra.mxu0 %v639
      %v803 = vpop.f32.mrf.mxu0
      %v804 = vadd.f32 %v690, %v803
      %v805 = vpop.f32.mrf.mxu0
      %806 = vmatprep.mubr.f32.mxu0 %v642
      %807 = vmatmul.mubr.f32.gmra.mxu0 %v641
      %v808 = vpop.f32.mrf.mxu0
      %v809 = vadd.f32 %v690, %v808
      %v810 = vpop.f32.mrf.mxu0
      %811 = vmatprep.mubr.f32.mxu0 %v644
      %812 = vmatmul.mubr.f32.gmra.mxu0 %v643
      %v813 = vpop.f32.mrf.mxu0
      %v814 = vadd.f32 %v690, %v813
      %v815 = vpop.f32.mrf.mxu0
      %816 = vmatprep.mubr.f32.mxu0 %v646
      %817 = vmatmul.mubr.f32.gmra.mxu0 %v645
      %v818 = vpop.f32.mrf.mxu0
      %v819 = vadd.f32 %v690, %v818
      %v820 = vpop.f32.mrf.mxu0
      %821 = vmatprep.mubr.f32.mxu0 %v648
      %822 = vmatmul.mubr.f32.gmra.mxu0 %v647
      %v823 = vpop.f32.mrf.mxu0
      %v824 = vadd.f32 %v690, %v823
      %v825 = vpop.f32.mrf.mxu0
      %826 = vmatprep.mubr.f32.mxu0 %v650
      %827 = vmatmul.mubr.f32.gmra.mxu0 %v649
      %v828 = vpop.f32.mrf.mxu0
      %v829 = vadd.f32 %v690, %v828
      %v830 = vpop.f32.mrf.mxu0
      %831 = vmatprep.mubr.f32.mxu0 %v652
      %832 = vmatmul.mubr.f32.gmra.mxu0 %v651
      %v833 = vpop.f32.mrf.mxu0
      %v834 = vadd.f32 %v690, %v833
      %v835 = vpop.f32.mrf.mxu0
      %836 = vdwg.mxu0
      %vm837 = vcmp.gt.f32.partialorder %v759, 0.0
      %vm838 = vcmp.gt.f32.partialorder %v764, 0.0
      %vm839 = vcmp.gt.f32.partialorder %v769, 0.0
      %vm840 = vcmp.gt.f32.partialorder %v774, 0.0
      %vm841 = vcmp.gt.f32.partialorder %v779, 0.0
      %vm842 = vcmp.gt.f32.partialorder %v784, 0.0
      %vm843 = vcmp.gt.f32.partialorder %v789, 0.0
      %vm844 = vcmp.gt.f32.partialorder %v794, 0.0
      %vm845 = vcmp.gt.f32.partialorder %v799, 0.0
      %vm846 = vcmp.gt.f32.partialorder %v804, 0.0
      %vm847 = vcmp.gt.f32.partialorder %v809, 0.0
      %vm848 = vcmp.gt.f32.partialorder %v814, 0.0
      %vm849 = vcmp.gt.f32.partialorder %v819, 0.0
      %vm850 = vcmp.gt.f32.partialorder %v824, 0.0
      %vm851 = vcmp.gt.f32.partialorder %v829, 0.0
      %vm852 = vcmp.gt.f32.partialorder %v834, 0.0
      %v853 = vmul.f32 %v759, 0.01
      %v854 = vmul.f32 %v764, 0.01
      %v855 = vmul.f32 %v769, 0.01
      %v856 = vmul.f32 %v774, 0.01
      %v857 = vmul.f32 %v779, 0.01
      %v858 = vmul.f32 %v784, 0.01
      %v859 = vmul.f32 %v789, 0.01
      %v860 = vmul.f32 %v794, 0.01
      %v861 = vmul.f32 %v799, 0.01
      %v862 = vmul.f32 %v804, 0.01
      %v863 = vmul.f32 %v809, 0.01
      %v864 = vmul.f32 %v814, 0.01
      %v865 = vmul.f32 %v819, 0.01
      %v866 = vmul.f32 %v824, 0.01
      %v867 = vmul.f32 %v829, 0.01
      %v868 = vmul.f32 %v834, 0.01
      %v869 = vsel %vm837, %v759, %v853
      %v870 = vsel %vm838, %v764, %v854
      %v871 = vsel %vm839, %v769, %v855
      %v872 = vsel %vm840, %v774, %v856
      %v873 = vsel %vm841, %v779, %v857
      %v874 = vsel %vm842, %v784, %v858
      %v875 = vsel %vm843, %v789, %v859
      %v876 = vsel %vm844, %v794, %v860
      %v877 = vsel %vm845, %v799, %v861
      %v878 = vsel %vm846, %v804, %v862
      %v879 = vsel %vm847, %v809, %v863
      %v880 = vsel %vm848, %v814, %v864
      %v881 = vsel %vm849, %v819, %v865
      %v882 = vsel %vm850, %v824, %v866
      %v883 = vsel %vm851, %v829, %v867
      %v884 = vsel %vm852, %v834, %v868
      %v885 = vld [vmem:[%s5] sm:$0xff]
      %v886 = vld [vmem:[%s5 + $0x8] sm:$0xff]
      %v887 = vld [vmem:[%s5 + $0x10] sm:$0xff]
      %v888 = vld [vmem:[%s5 + $0x18] sm:$0xff]
      %v889 = vld [vmem:[%s5 + $0x20] sm:$0xff]
      %v890 = vld [vmem:[%s5 + $0x28] sm:$0xff]
      %v891 = vld [vmem:[%s5 + $0x30] sm:$0xff]
      %v892 = vld [vmem:[%s5 + $0x38] sm:$0xff]
      %v893 = vld [vmem:[%s5 + $0x40] sm:$0xff]
      %v894 = vld [vmem:[%s5 + $0x48] sm:$0xff]
      %v895 = vld [vmem:[%s5 + $0x50] sm:$0xff]
      %v896 = vld [vmem:[%s5 + $0x58] sm:$0xff]
      %v897 = vld [vmem:[%s5 + $0x60] sm:$0xff]
      %v898 = vld [vmem:[%s5 + $0x68] sm:$0xff]
      %v899 = vld [vmem:[%s5 + $0x70] sm:$0xff]
      %v900 = vld [vmem:[%s5 + $0x78] sm:$0xff]
      %v901 = vld [vmem:[%s6] sm:$0x1]
      %v903 = vlaneseq
      %v904 = vshrl.u32 %v903, 7
      %v905 = vsub.s32 0, %v904
      %v906 = vrot.slane %v901, %v905
      %908 = vmatprep.subr.mxu0 0.0
      %909 = vmatpush1.msra.mxu0 %v900
      %910 = vmatprep.subr.mxu0 0.0
      %911 = vmatpush1.msra.mxu0 %v899
      %912 = vmatprep.subr.mxu0 0.0
      %913 = vmatpush1.msra.mxu0 %v898
      %914 = vmatprep.subr.mxu0 0.0
      %915 = vmatpush1.msra.mxu0 %v897
      %916 = vmatprep.subr.mxu0 0.0
      %917 = vmatpush1.msra.mxu0 %v896
      %918 = vmatprep.subr.mxu0 0.0
      %919 = vmatpush1.msra.mxu0 %v895
      %920 = vmatprep.subr.mxu0 0.0
      %921 = vmatpush1.msra.mxu0 %v894
      %922 = vmatprep.subr.mxu0 0.0
      %923 = vmatpush1.msra.mxu0 %v893
      %924 = vmatprep.subr.mxu0 0.0
      %925 = vmatpush1.msra.mxu0 %v892
      %926 = vmatprep.subr.mxu0 0.0
      %927 = vmatpush1.msra.mxu0 %v891
      %928 = vmatprep.subr.mxu0 0.0
      %929 = vmatpush1.msra.mxu0 %v890
      %930 = vmatprep.subr.mxu0 0.0
      %931 = vmatpush1.msra.mxu0 %v889
      %932 = vmatprep.subr.mxu0 0.0
      %933 = vmatpush1.msra.mxu0 %v888
      %934 = vmatprep.subr.mxu0 0.0
      %935 = vmatpush1.msra.mxu0 %v887
      %936 = vmatprep.subr.mxu0 0.0
      %937 = vmatpush1.msra.mxu0 %v886
      %938 = vmatprep.subr.mxu0 0.0
      %939 = vmatpush1.msra.mxu0 %v885
      %940 = vmatprep.subr.mxu0 0.0
      %941 = vmatpush2.msra.mxu0 0.0
      %942 = vmatprep.subr.mxu0 0.0
      %943 = vmatpush2.msra.mxu0 0.0
      %944 = vmatprep.subr.mxu0 0.0
      %945 = vmatpush2.msra.mxu0 0.0
      %946 = vmatprep.subr.mxu0 0.0
      %947 = vmatpush2.msra.mxu0 0.0
      %948 = vmatprep.subr.mxu0 0.0
      %949 = vmatpush2.msra.mxu0 0.0
      %950 = vmatprep.subr.mxu0 0.0
      %951 = vmatpush2.msra.mxu0 0.0
      %952 = vmatprep.subr.mxu0 0.0
      %953 = vmatpush2.msra.mxu0 0.0
      %954 = vmatprep.subr.mxu0 0.0
      %955 = vmatpush2.msra.mxu0 0.0
      %956 = vmatprep.subr.mxu0 0.0
      %957 = vmatpush2.msra.mxu0 0.0
      %958 = vmatprep.subr.mxu0 0.0
      %959 = vmatpush2.msra.mxu0 0.0
      %960 = vmatprep.subr.mxu0 0.0
      %961 = vmatpush2.msra.mxu0 0.0
      %962 = vmatprep.subr.mxu0 0.0
      %963 = vmatpush2.msra.mxu0 0.0
      %964 = vmatprep.subr.mxu0 0.0
      %965 = vmatpush2.msra.mxu0 0.0
      %966 = vmatprep.subr.mxu0 0.0
      %967 = vmatpush2.msra.mxu0 0.0
      %968 = vmatprep.subr.mxu0 0.0
      %969 = vmatpush2.msra.mxu0 0.0
      %970 = vmatprep.subr.mxu0 0.0
      %971 = vmatpush2.msra.mxu0 0.0
      %972 = vmatprep.mubr.f32.mxu0 0.0
      %973 = vmatmul.mubr.f32.gmra.mxu0 %v869
      %v974 = vpop.f32.mrf.mxu0
      %v975 = vadd.f32 %v906, %v974
      %v976 = vpop.f32.mrf.mxu0
      %977 = vmatprep.mubr.f32.mxu0 0.0
      %978 = vmatmul.mubr.f32.gmra.mxu0 %v870
      %v979 = vpop.f32.mrf.mxu0
      %v980 = vadd.f32 %v906, %v979
      %v981 = vpop.f32.mrf.mxu0
      %982 = vmatprep.mubr.f32.mxu0 0.0
      %983 = vmatmul.mubr.f32.gmra.mxu0 %v871
      %v984 = vpop.f32.mrf.mxu0
      %v985 = vadd.f32 %v906, %v984
      %v986 = vpop.f32.mrf.mxu0
      %987 = vmatprep.mubr.f32.mxu0 0.0
      %988 = vmatmul.mubr.f32.gmra.mxu0 %v872
      %v989 = vpop.f32.mrf.mxu0
      %v990 = vadd.f32 %v906, %v989
      %v991 = vpop.f32.mrf.mxu0
      %992 = vmatprep.mubr.f32.mxu0 0.0
      %993 = vmatmul.mubr.f32.gmra.mxu0 %v873
      %v994 = vpop.f32.mrf.mxu0
      %v995 = vadd.f32 %v906, %v994
      %v996 = vpop.f32.mrf.mxu0
      %997 = vmatprep.mubr.f32.mxu0 0.0
      %998 = vmatmul.mubr.f32.gmra.mxu0 %v874
      %v999 = vpop.f32.mrf.mxu0
      %v1000 = vadd.f32 %v906, %v999
      %v1001 = vpop.f32.mrf.mxu0
      %1002 = vmatprep.mubr.f32.mxu0 0.0
      %1003 = vmatmul.mubr.f32.gmra.mxu0 %v875
      %v1004 = vpop.f32.mrf.mxu0
      %v1005 = vadd.f32 %v906, %v1004
      %v1006 = vpop.f32.mrf.mxu0
      %1007 = vmatprep.mubr.f32.mxu0 0.0
      %1008 = vmatmul.mubr.f32.gmra.mxu0 %v876
      %v1009 = vpop.f32.mrf.mxu0
      %v1010 = vadd.f32 %v906, %v1009
      %v1011 = vpop.f32.mrf.mxu0
      %1012 = vmatprep.mubr.f32.mxu0 0.0
      %1013 = vmatmul.mubr.f32.gmra.mxu0 %v877
      %v1014 = vpop.f32.mrf.mxu0
      %v1015 = vadd.f32 %v906, %v1014
      %v1016 = vpop.f32.mrf.mxu0
      %1017 = vmatprep.mubr.f32.mxu0 0.0
      %1018 = vmatmul.mubr.f32.gmra.mxu0 %v878
      %v1019 = vpop.f32.mrf.mxu0
      %v1020 = vadd.f32 %v906, %v1019
      %v1021 = vpop.f32.mrf.mxu0
      %1022 = vmatprep.mubr.f32.mxu0 0.0
      %1023 = vmatmul.mubr.f32.gmra.mxu0 %v879
      %v1024 = vpop.f32.mrf.mxu0
      %v1025 = vadd.f32 %v906, %v1024
      %v1026 = vpop.f32.mrf.mxu0
      %1027 = vmatprep.mubr.f32.mxu0 0.0
      %1028 = vmatmul.mubr.f32.gmra.mxu0 %v880
      %v1029 = vpop.f32.mrf.mxu0
      %v1030 = vadd.f32 %v906, %v1029
      %v1031 = vpop.f32.mrf.mxu0
      %1032 = vmatprep.mubr.f32.mxu0 0.0
      %1033 = vmatmul.mubr.f32.gmra.mxu0 %v881
      %v1034 = vpop.f32.mrf.mxu0
      %v1035 = vadd.f32 %v906, %v1034
      %v1036 = vpop.f32.mrf.mxu0
      %1037 = vmatprep.mubr.f32.mxu0 0.0
      %1038 = vmatmul.mubr.f32.gmra.mxu0 %v882
      %v1039 = vpop.f32.mrf.mxu0
      %v1040 = vadd.f32 %v906, %v1039
      %v1041 = vpop.f32.mrf.mxu0
      %1042 = vmatprep.mubr.f32.mxu0 0.0
      %1043 = vmatmul.mubr.f32.gmra.mxu0 %v883
      %v1044 = vpop.f32.mrf.mxu0
      %v1045 = vadd.f32 %v906, %v1044
      %v1046 = vpop.f32.mrf.mxu0
      %1047 = vmatprep.mubr.f32.mxu0 0.0
      %1048 = vmatmul.mubr.f32.gmra.mxu0 %v884
      %v1049 = vpop.f32.mrf.mxu0
      %v1050 = vadd.f32 %v906, %v1049
      %v1051 = vpop.f32.mrf.mxu0
      %1052 = vdwg.mxu0
      %vm1053 = vcmp.gt.f32.partialorder %v975, 0.0
      %vm1054 = vcmp.gt.f32.partialorder %v980, 0.0
      %vm1055 = vcmp.gt.f32.partialorder %v985, 0.0
      %vm1056 = vcmp.gt.f32.partialorder %v990, 0.0
      %vm1057 = vcmp.gt.f32.partialorder %v995, 0.0
      %vm1058 = vcmp.gt.f32.partialorder %v1000, 0.0
      %vm1059 = vcmp.gt.f32.partialorder %v1005, 0.0
      %vm1060 = vcmp.gt.f32.partialorder %v1010, 0.0
      %vm1061 = vcmp.gt.f32.partialorder %v1015, 0.0
      %vm1062 = vcmp.gt.f32.partialorder %v1020, 0.0
      %vm1063 = vcmp.gt.f32.partialorder %v1025, 0.0
      %vm1064 = vcmp.gt.f32.partialorder %v1030, 0.0
      %vm1065 = vcmp.gt.f32.partialorder %v1035, 0.0
      %vm1066 = vcmp.gt.f32.partialorder %v1040, 0.0
      %vm1067 = vcmp.gt.f32.partialorder %v1045, 0.0
      %vm1068 = vcmp.gt.f32.partialorder %v1050, 0.0
      %v1069 = vmul.f32 %v975, 0.01
      %v1070 = vmul.f32 %v980, 0.01
      %v1071 = vmul.f32 %v985, 0.01
      %v1072 = vmul.f32 %v990, 0.01
      %v1073 = vmul.f32 %v995, 0.01
      %v1074 = vmul.f32 %v1000, 0.01
      %v1075 = vmul.f32 %v1005, 0.01
      %v1076 = vmul.f32 %v1010, 0.01
      %v1077 = vmul.f32 %v1015, 0.01
      %v1078 = vmul.f32 %v1020, 0.01
      %v1079 = vmul.f32 %v1025, 0.01
      %v1080 = vmul.f32 %v1030, 0.01
      %v1081 = vmul.f32 %v1035, 0.01
      %v1082 = vmul.f32 %v1040, 0.01
      %v1083 = vmul.f32 %v1045, 0.01
      %v1084 = vmul.f32 %v1050, 0.01
      %v1085 = vsel %vm1053, %v975, %v1069
      %v1086 = vsel %vm1054, %v980, %v1070
      %v1087 = vsel %vm1055, %v985, %v1071
      %v1088 = vsel %vm1056, %v990, %v1072
      %v1089 = vsel %vm1057, %v995, %v1073
      %v1090 = vsel %vm1058, %v1000, %v1074
      %v1091 = vsel %vm1059, %v1005, %v1075
      %v1092 = vsel %vm1060, %v1010, %v1076
      %v1093 = vsel %vm1061, %v1015, %v1077
      %v1094 = vsel %vm1062, %v1020, %v1078
      %v1095 = vsel %vm1063, %v1025, %v1079
      %v1096 = vsel %vm1064, %v1030, %v1080
      %v1097 = vsel %vm1065, %v1035, %v1081
      %v1098 = vsel %vm1066, %v1040, %v1082
      %v1099 = vsel %vm1067, %v1045, %v1083
      %v1100 = vsel %vm1068, %v1050, %v1084
      %v1101 = vld [vmem:[%s7] sm:$0xff]
      %v1102 = vld [vmem:[%s7 + $0x8] sm:$0xff]
      %v1103 = vld [vmem:[%s7 + $0x10] sm:$0xff]
      %v1104 = vld [vmem:[%s7 + $0x18] sm:$0xff]
      %v1105 = vld [vmem:[%s7 + $0x20] sm:$0xff]
      %v1106 = vld [vmem:[%s7 + $0x28] sm:$0xff]
      %v1107 = vld [vmem:[%s7 + $0x30] sm:$0xff]
      %v1108 = vld [vmem:[%s7 + $0x38] sm:$0xff]
      %v1109 = vld [vmem:[%s7 + $0x40] sm:$0xff]
      %v1110 = vld [vmem:[%s7 + $0x48] sm:$0xff]
      %v1111 = vld [vmem:[%s7 + $0x50] sm:$0xff]
      %v1112 = vld [vmem:[%s7 + $0x58] sm:$0xff]
      %v1113 = vld [vmem:[%s7 + $0x60] sm:$0xff]
      %v1114 = vld [vmem:[%s7 + $0x68] sm:$0xff]
      %v1115 = vld [vmem:[%s7 + $0x70] sm:$0xff]
      %v1116 = vld [vmem:[%s7 + $0x78] sm:$0xff]
      %v1117 = vld [vmem:[%s8] sm:$0x1]
      %v1119 = vlaneseq
      %v1120 = vshrl.u32 %v1119, 7
      %v1121 = vsub.s32 0, %v1120
      %v1122 = vrot.slane %v1117, %v1121
      %1124 = vmatprep.subr.mxu0 0.0
      %1125 = vmatpush1.msra.mxu0 %v1116
      %1126 = vmatprep.subr.mxu0 0.0
      %1127 = vmatpush1.msra.mxu0 %v1115
      %1128 = vmatprep.subr.mxu0 0.0
      %1129 = vmatpush1.msra.mxu0 %v1114
      %1130 = vmatprep.subr.mxu0 0.0
      %1131 = vmatpush1.msra.mxu0 %v1113
      %1132 = vmatprep.subr.mxu0 0.0
      %1133 = vmatpush1.msra.mxu0 %v1112
      %1134 = vmatprep.subr.mxu0 0.0
      %1135 = vmatpush1.msra.mxu0 %v1111
      %1136 = vmatprep.subr.mxu0 0.0
      %1137 = vmatpush1.msra.mxu0 %v1110
      %1138 = vmatprep.subr.mxu0 0.0
      %1139 = vmatpush1.msra.mxu0 %v1109
      %1140 = vmatprep.subr.mxu0 0.0
      %1141 = vmatpush1.msra.mxu0 %v1108
      %1142 = vmatprep.subr.mxu0 0.0
      %1143 = vmatpush1.msra.mxu0 %v1107
      %1144 = vmatprep.subr.mxu0 0.0
      %1145 = vmatpush1.msra.mxu0 %v1106
      %1146 = vmatprep.subr.mxu0 0.0
      %1147 = vmatpush1.msra.mxu0 %v1105
      %1148 = vmatprep.subr.mxu0 0.0
      %1149 = vmatpush1.msra.mxu0 %v1104
      %1150 = vmatprep.subr.mxu0 0.0
      %1151 = vmatpush1.msra.mxu0 %v1103
      %1152 = vmatprep.subr.mxu0 0.0
      %1153 = vmatpush1.msra.mxu0 %v1102
      %1154 = vmatprep.subr.mxu0 0.0
      %1155 = vmatpush1.msra.mxu0 %v1101
      %1156 = vmatprep.subr.mxu0 0.0
      %1157 = vmatpush2.msra.mxu0 0.0
      %1158 = vmatprep.subr.mxu0 0.0
      %1159 = vmatpush2.msra.mxu0 0.0
      %1160 = vmatprep.subr.mxu0 0.0
      %1161 = vmatpush2.msra.mxu0 0.0
      %1162 = vmatprep.subr.mxu0 0.0
      %1163 = vmatpush2.msra.mxu0 0.0
      %1164 = vmatprep.subr.mxu0 0.0
      %1165 = vmatpush2.msra.mxu0 0.0
      %1166 = vmatprep.subr.mxu0 0.0
      %1167 = vmatpush2.msra.mxu0 0.0
      %1168 = vmatprep.subr.mxu0 0.0
      %1169 = vmatpush2.msra.mxu0 0.0
      %1170 = vmatprep.subr.mxu0 0.0
      %1171 = vmatpush2.msra.mxu0 0.0
      %1172 = vmatprep.subr.mxu0 0.0
      %1173 = vmatpush2.msra.mxu0 0.0
      %1174 = vmatprep.subr.mxu0 0.0
      %1175 = vmatpush2.msra.mxu0 0.0
      %1176 = vmatprep.subr.mxu0 0.0
      %1177 = vmatpush2.msra.mxu0 0.0
      %1178 = vmatprep.subr.mxu0 0.0
      %1179 = vmatpush2.msra.mxu0 0.0
      %1180 = vmatprep.subr.mxu0 0.0
      %1181 = vmatpush2.msra.mxu0 0.0
      %1182 = vmatprep.subr.mxu0 0.0
      %1183 = vmatpush2.msra.mxu0 0.0
      %1184 = vmatprep.subr.mxu0 0.0
      %1185 = vmatpush2.msra.mxu0 0.0
      %1186 = vmatprep.subr.mxu0 0.0
      %1187 = vmatpush2.msra.mxu0 0.0
      %1188 = vmatprep.mubr.f32.mxu0 0.0
      %1189 = vmatmul.mubr.f32.gmra.mxu0 %v1085
      %v1190 = vpop.f32.mrf.mxu0
      %v1191 = vadd.f32 %v1122, %v1190
      %v1192 = vpop.f32.mrf.mxu0
      %1193 = vmatprep.mubr.f32.mxu0 0.0
      %1194 = vmatmul.mubr.f32.gmra.mxu0 %v1086
      %v1195 = vpop.f32.mrf.mxu0
      %v1196 = vadd.f32 %v1122, %v1195
      %v1197 = vpop.f32.mrf.mxu0
      %1198 = vmatprep.mubr.f32.mxu0 0.0
      %1199 = vmatmul.mubr.f32.gmra.mxu0 %v1087
      %v1200 = vpop.f32.mrf.mxu0
      %v1201 = vadd.f32 %v1122, %v1200
      %v1202 = vpop.f32.mrf.mxu0
      %1203 = vmatprep.mubr.f32.mxu0 0.0
      %1204 = vmatmul.mubr.f32.gmra.mxu0 %v1088
      %v1205 = vpop.f32.mrf.mxu0
      %v1206 = vadd.f32 %v1122, %v1205
      %v1207 = vpop.f32.mrf.mxu0
      %1208 = vmatprep.mubr.f32.mxu0 0.0
      %1209 = vmatmul.mubr.f32.gmra.mxu0 %v1089
      %v1210 = vpop.f32.mrf.mxu0
      %v1211 = vadd.f32 %v1122, %v1210
      %v1212 = vpop.f32.mrf.mxu0
      %1213 = vmatprep.mubr.f32.mxu0 0.0
      %1214 = vmatmul.mubr.f32.gmra.mxu0 %v1090
      %v1215 = vpop.f32.mrf.mxu0
      %v1216 = vadd.f32 %v1122, %v1215
      %v1217 = vpop.f32.mrf.mxu0
      %1218 = vmatprep.mubr.f32.mxu0 0.0
      %1219 = vmatmul.mubr.f32.gmra.mxu0 %v1091
      %v1220 = vpop.f32.mrf.mxu0
      %v1221 = vadd.f32 %v1122, %v1220
      %v1222 = vpop.f32.mrf.mxu0
      %1223 = vmatprep.mubr.f32.mxu0 0.0
      %1224 = vmatmul.mubr.f32.gmra.mxu0 %v1092
      %v1225 = vpop.f32.mrf.mxu0
      %v1226 = vadd.f32 %v1122, %v1225
      %v1227 = vpop.f32.mrf.mxu0
      %1228 = vmatprep.mubr.f32.mxu0 0.0
      %1229 = vmatmul.mubr.f32.gmra.mxu0 %v1093
      %v1230 = vpop.f32.mrf.mxu0
      %v1231 = vadd.f32 %v1122, %v1230
      %v1232 = vpop.f32.mrf.mxu0
      %1233 = vmatprep.mubr.f32.mxu0 0.0
      %1234 = vmatmul.mubr.f32.gmra.mxu0 %v1094
      %v1235 = vpop.f32.mrf.mxu0
      %v1236 = vadd.f32 %v1122, %v1235
      %v1237 = vpop.f32.mrf.mxu0
      %1238 = vmatprep.mubr.f32.mxu0 0.0
      %1239 = vmatmul.mubr.f32.gmra.mxu0 %v1095
      %v1240 = vpop.f32.mrf.mxu0
      %v1241 = vadd.f32 %v1122, %v1240
      %v1242 = vpop.f32.mrf.mxu0
      %1243 = vmatprep.mubr.f32.mxu0 0.0
      %1244 = vmatmul.mubr.f32.gmra.mxu0 %v1096
      %v1245 = vpop.f32.mrf.mxu0
      %v1246 = vadd.f32 %v1122, %v1245
      %v1247 = vpop.f32.mrf.mxu0
      %1248 = vmatprep.mubr.f32.mxu0 0.0
      %1249 = vmatmul.mubr.f32.gmra.mxu0 %v1097
      %v1250 = vpop.f32.mrf.mxu0
      %v1251 = vadd.f32 %v1122, %v1250
      %v1252 = vpop.f32.mrf.mxu0
      %1253 = vmatprep.mubr.f32.mxu0 0.0
      %1254 = vmatmul.mubr.f32.gmra.mxu0 %v1098
      %v1255 = vpop.f32.mrf.mxu0
      %v1256 = vadd.f32 %v1122, %v1255
      %v1257 = vpop.f32.mrf.mxu0
      %1258 = vmatprep.mubr.f32.mxu0 0.0
      %1259 = vmatmul.mubr.f32.gmra.mxu0 %v1099
      %v1260 = vpop.f32.mrf.mxu0
      %v1261 = vadd.f32 %v1122, %v1260
      %v1262 = vpop.f32.mrf.mxu0
      %1263 = vmatprep.mubr.f32.mxu0 0.0
      %1264 = vmatmul.mubr.f32.gmra.mxu0 %v1100
      %v1265 = vpop.f32.mrf.mxu0
      %v1266 = vadd.f32 %v1122, %v1265
      %v1267 = vpop.f32.mrf.mxu0
      %1268 = vdwg.mxu0
      %1269 = vst [vmem:[%s334] sm:$0xff] %v1191
      %1270 = vst [vmem:[%s334 + $0x8] sm:$0xff] %v1196
      %1271 = vst [vmem:[%s334 + $0x10] sm:$0xff] %v1201
      %1272 = vst [vmem:[%s334 + $0x18] sm:$0xff] %v1206
      %1273 = vst [vmem:[%s334 + $0x20] sm:$0xff] %v1211
      %1274 = vst [vmem:[%s334 + $0x28] sm:$0xff] %v1216
      %1275 = vst [vmem:[%s334 + $0x30] sm:$0xff] %v1221
      %1276 = vst [vmem:[%s334 + $0x38] sm:$0xff] %v1226
      %1277 = vst [vmem:[%s334 + $0x40] sm:$0xff] %v1231
      %1278 = vst [vmem:[%s334 + $0x48] sm:$0xff] %v1236
      %1279 = vst [vmem:[%s334 + $0x50] sm:$0xff] %v1241
      %1280 = vst [vmem:[%s334 + $0x58] sm:$0xff] %v1246
      %1281 = vst [vmem:[%s334 + $0x60] sm:$0xff] %v1251
      %1282 = vst [vmem:[%s334 + $0x68] sm:$0xff] %v1256
      %1283 = vst [vmem:[%s334 + $0x70] sm:$0xff] %v1261
      %1284 = vst [vmem:[%s334 + $0x78] sm:$0xff] %v1266
      %s1285 = smul.u32 16, %s20
      %p1286 = scmp.lt.s32.totalorder %s1285, 31
      %s1287 = scalar_select %p1286, %s1285, 31
      %s1288 = smul.addr %s1287, 8
      %s1289 = scalar_lea.vmem %s9, %s1288
      // Predicated region
      $region57: #{connector_forward.1} parent=55 // pred_check
        %p1290 = pneg %p232
      $region58: #{connector_forward.1} parent=55 // pred_check_branch
        %1292 = sbr.rel (%p1290) target = $region60
      $region59: #{connector_forward.1} parent=55 // pred_region
        %s1293 = smul.u32 16, %s20
      $region60: #{connector_forward.1} parent=55 // pred_fallthru
        _
    $region56: #{connector_forward.1} parent=5 // pred_fallthru
      _
    %p1294 = scmp.le.s32.totalorder 2, %s15
    // Predicated region
    $region61: #{connector_forward.1} parent=5 // pred_check
      %p1295 = pneg %p1294
    $region62: #{connector_forward.1} parent=5 // pred_check_branch
      %1297 = sbr.rel (%p1295) target = $region64
    $region63: #{connector_forward.1} parent=5 // pred_region
      %s1298 = ssub.s32 %s15, 2
      // Predicated region
      $region65: #{connector_forward.1} parent=63 // pred_check
        %p1299 = pneg %p238
      $region66: #{connector_forward.1} parent=63 // pred_check_branch
        %1301 = sbr.rel (%p1299) target = $region68
      $region67: #{connector_forward.1} parent=63 // pred_region
        %s1302 = smul.u32 16, %s21
        %p1303 = scmp.lt.s32.totalorder %s1302, 31
        %s1304 = scalar_select %p1303, %s1302, 31
        %s1305 = smul.addr %s1304, 8
        %s1306 = scalar_lea.vmem %s9, %s1305
      $region68: #{connector_forward.1} parent=63 // pred_fallthru
        _
    $region64: #{connector_forward.1} parent=5 // pred_fallthru
      _
  $region6: #{connector_forward.1} parent=0 // loop_footer
    %s19 = sadd.s32 1, %s15
  $region7: #{connector_forward.1} parent=0 // loop_footer_branch
    %14 = sbr.rel target = $region3
  $region8: #{connector_forward.1} parent=0 // loop_exit
    _

</llo_original>
